<compile_context>
chip_gen: v7x
topology: tpu7x:2x2x1
jax: 0.10.0
libtpu: 0.0.40
codegen_flags: <defaults>
</compile_context>

<pallas_src>
import functools

import numpy as np

import jax
import jax.numpy as jnp
from jax.experimental import pallas as pl
from jax.experimental.pallas import tpu as pltpu

EPS = 1e-5
CPAD = 128              # lane-dense output channel padding
# Set True on v6e/v7x to halve GEMM input DMA bytes and use the bf16 MXU path
# (f32 accumulation is kept).  Default False to match PyTorch f32 numerics.
USE_BF16_MXU_INPUTS = False
VMEM_LIMIT = 32 * 1024 * 1024


def _round_up(v, m):
    return ((v + m - 1) // m) * m


# ----------------------------------------------------------------------------
# Pallas kernel 1: GEMM + fused training-mode BatchNorm (single grid step)
# ----------------------------------------------------------------------------
def _gemm_bn_kernel(p_ref, w_ref, a_ref, g_ref, b_ref, o_ref):
    # p_ref: (Mp, K)   w_ref: (K, 128)   a_ref: (128, 128) pooling/averaging
    # g_ref/b_ref: (1, 128) gamma/beta (phase-replicated, zero padded)
    # o_ref: (Mp, 128)
    z = jnp.dot(p_ref[...], w_ref[...], preferred_element_type=jnp.float32)
    # Per-column batch statistics (padded rows are zero -> contribute nothing).
    s1 = jnp.sum(z, axis=0, keepdims=True)
    s2 = jnp.sum(z * z, axis=0, keepdims=True)
    rows = jax.lax.broadcasted_iota(jnp.int32, (8, CPAD), 0)
    st = jnp.where(rows == 0, jnp.broadcast_to(s1, (8, CPAD)),
                   jnp.where(rows == 1, jnp.broadcast_to(s2, (8, CPAD)), 0.0))
    # Pool sums over the phase group of each channel and divide by the element
    # count (both baked into a_ref), replicated back per column.
    pooled = jnp.dot(st, a_ref[...], preferred_element_type=jnp.float32)
    mean = pooled[0:1, :]
    ex2 = pooled[1:2, :]
    # NOTE: E[x^2]-E[x]^2 in f32 — cancellation-prone if |mean| >> std, fine at
    # this network's scale (verified against the XLA reference below).
    var = ex2 - mean * mean
    scale = g_ref[...] * jax.lax.rsqrt(var + EPS)     # padded cols: gamma=0 -> 0
    shift = b_ref[...] - mean * scale
    o_ref[...] = z * scale + shift


def _fused_linear_bn(P, Wm, gamma_cols, beta_cols, pool_mat):
    """One pallas_call: z = P @ Wm, then per-channel training-mode BN."""
    M, K = P.shape
    ccols = Wm.shape[1]
    Mp = _round_up(max(M, 8), 8)
    # Single grid step: the whole GEMM output stays in VMEM so batch statistics
    # can be computed and applied in the same kernel invocation.
    # TODO(synk): for large images fall back to a two-pass tiled variant.
    assert Mp * (K + CPAD) * 4 <= 8 * 1024 * 1024, "single-tile fused BN only"
    Pp = jnp.pad(P, ((0, Mp - M), (0, 0)))           # zero rows: no effect on stats
    Wp = jnp.pad(Wm, ((0, 0), (0, CPAD - ccols)))    # lane-dense (128) output cols
    if USE_BF16_MXU_INPUTS:
        Pp = Pp.astype(jnp.bfloat16)
        Wp = Wp.astype(jnp.bfloat16)
    flops = 2 * Mp * K * CPAD + 2 * 8 * CPAD * CPAD + 6 * Mp * CPAD
    bytes_acc = 4 * (Mp * K + K * CPAD + CPAD * CPAD + 2 * CPAD + Mp * CPAD)
    z = pl.pallas_call(
        _gemm_bn_kernel,
        out_shape=jax.ShapeDtypeStruct((Mp, CPAD), jnp.float32),
        grid=(1,),
        in_specs=[
            pl.BlockSpec((Mp, K), lambda i: (0, 0)),
            pl.BlockSpec((K, CPAD), lambda i: (0, 0)),
            pl.BlockSpec((CPAD, CPAD), lambda i: (0, 0)),
            pl.BlockSpec((1, CPAD), lambda i: (0, 0)),
            pl.BlockSpec((1, CPAD), lambda i: (0, 0)),
        ],
        out_specs=pl.BlockSpec((Mp, CPAD), lambda i: (0, 0)),
        compiler_params=pltpu.CompilerParams(
            dimension_semantics=("arbitrary",),
            vmem_limit_bytes=VMEM_LIMIT),
        cost_estimate=pl.CostEstimate(flops=flops, transcendentals=CPAD,
                                      bytes_accessed=bytes_acc),
    )(Pp, Wp, pool_mat, gamma_cols, beta_cols)
    return z, M


# ----------------------------------------------------------------------------
# Pallas kernel 2: plain tiled GEMM + bias (last layer, no BN, no stats work)
# ----------------------------------------------------------------------------
def _gemm_bias_kernel(p_ref, w_ref, b_ref, o_ref):
    o_ref[...] = (jnp.dot(p_ref[...], w_ref[...],
                          preferred_element_type=jnp.float32) + b_ref[...])


def _linear_bias(P, Wm, bias):
    M, K = P.shape
    ccols = Wm.shape[1]
    tile_m = min(1024, _round_up(max(M, 8), 8))      # raised cap (perf review)
    Mp = _round_up(M, tile_m)
    gm = Mp // tile_m
    Pp = jnp.pad(P, ((0, Mp - M), (0, 0)))
    Wp = jnp.pad(Wm, ((0, 0), (0, CPAD - ccols)))
    bvec = jnp.pad(bias, (0, CPAD - ccols)).reshape(1, CPAD)
    if USE_BF16_MXU_INPUTS:
        Pp = Pp.astype(jnp.bfloat16)
        Wp = Wp.astype(jnp.bfloat16)
    flops = 2 * Mp * K * CPAD
    bytes_acc = 4 * (Mp * K + K * CPAD + CPAD + Mp * CPAD)
    z = pl.pallas_call(
        _gemm_bias_kernel,
        out_shape=jax.ShapeDtypeStruct((Mp, CPAD), jnp.float32),
        grid=(gm,),
        in_specs=[
            pl.BlockSpec((tile_m, K), lambda i: (i, 0)),
            pl.BlockSpec((K, CPAD), lambda i: (0, 0)),
            pl.BlockSpec((1, CPAD), lambda i: (0, 0)),
        ],
        out_specs=pl.BlockSpec((tile_m, CPAD), lambda i: (i, 0)),
        compiler_params=pltpu.CompilerParams(
            dimension_semantics=("parallel",),
            vmem_limit_bytes=VMEM_LIMIT),
        cost_estimate=pl.CostEstimate(flops=flops, transcendentals=0,
                                      bytes_accessed=bytes_acc),
    )(Pp, Wp, bvec)
    return z, M


# ----------------------------------------------------------------------------
# Glue (XLA wrapper): im2col, pooling matrix, layers
# ----------------------------------------------------------------------------
def _pool_matrix(c_out, n_phase, row_count):
    """(128,128) constant: pooled/averaged per-channel stats, replicated back to
    every phase column.  n_phase=1 -> diag(1/M) on the valid columns."""
    n_valid = n_phase * c_out
    idx = np.arange(n_valid)
    same = (idx[:, None] % c_out) == (idx[None, :] % c_out)
    a = np.zeros((CPAD, CPAD), np.float32)
    a[:n_valid, :n_valid] = same.astype(np.float32) / float(n_phase * row_count)
    return jnp.asarray(a)


def _im2col(x_pad, k, stride, Ho, Wo):
    # TODO(synk): fuse im2col into the GEMM kernel with a halo BlockSpec for
    # large H,W; at this size it is cheap XLA glue.
    cols = []
    for kh in range(k):
        for kw in range(k):
            cols.append(
                x_pad[:, kh:kh + stride * Ho:stride, kw:kw + stride * Wo:stride, :])
    N = x_pad.shape[0]
    C = x_pad.shape[3]
    return jnp.stack(cols, axis=3).reshape(N * Ho * Wo, k * k * C)


def conv2d_bn(x, w, gamma, beta, *, stride, padding):
    """Conv2d(stride, padding) + training-mode BatchNorm2d, fused in one kernel.
    The conv bias is omitted: it is exactly cancelled by the BN mean."""
    N, H, W_, Cin = x.shape
    Cout, _, k, _ = w.shape
    Ho = (H + 2 * padding - k) // stride + 1
    Wo = (W_ + 2 * padding - k) // stride + 1
    xp = jnp.pad(x, ((0, 0), (padding, padding), (padding, padding), (0, 0)))
    P = _im2col(xp, k, stride, Ho, Wo)
    Wm = jnp.transpose(w, (2, 3, 1, 0)).reshape(k * k * Cin, Cout)
    M = N * Ho * Wo
    gcols = jnp.pad(gamma, (0, CPAD - Cout)).reshape(1, CPAD)
    bcols = jnp.pad(beta, (0, CPAD - Cout)).reshape(1, CPAD)
    z, M = _fused_linear_bn(P, Wm, gcols, bcols, _pool_matrix(Cout, 1, M))
    return z[:M, :Cout].reshape(N, Ho, Wo, Cout)


def conv_transpose2d_s2_bn(x, w, gamma, beta):
    """ConvTranspose2d(k=3, stride=2, padding=1, output_padding=1) + BN via the
    exact sub-pixel decomposition: one 2x2-patch GEMM producing 4*Cout phase
    columns (BN stats pooled over phases inside the kernel), then pixel
    shuffle.  No zero-dilated input (4x fewer MACs)."""
    N, H, W_, Cin = x.shape
    _, Cout, k, _ = w.shape            # k == 3, PyTorch layout (Cin, Cout, kh, kw)
    xp = jnp.pad(x, ((0, 0), (0, 1), (0, 1), (0, 0)))
    cols = [xp[:, a:a + H, b:b + W_, :] for a in range(2) for b in range(2)]
    P = jnp.stack(cols, axis=3).reshape(N * H * W_, 4 * Cin)   # cols = (a, b, ci)
    # Output row parity r uses kernel row sel[r, a, :] at input offset a
    # (from oh = 2*ih - 1 + kh):  even row -> w[..,1,..];  odd row -> w[..,2,..]
    # at offset 0 and w[..,0,..] at offset 1 (same for columns).
    sel = (jnp.zeros((2, 2, 3), jnp.float32)
           .at[0, 0, 1].set(1.0)
           .at[1, 0, 2].set(1.0)
           .at[1, 1, 0].set(1.0))
    W4 = jnp.einsum('rah,sbv,iohv->abirso', sel, sel, w).reshape(4 * Cin, 4 * Cout)
    M = N * H * W_
    gcols = jnp.pad(jnp.tile(gamma, 4), (0, CPAD - 4 * Cout)).reshape(1, CPAD)
    bcols = jnp.pad(jnp.tile(beta, 4), (0, CPAD - 4 * Cout)).reshape(1, CPAD)
    z, M = _fused_linear_bn(P, W4, gcols, bcols, _pool_matrix(Cout, 4, M))
    # Pixel shuffle: (n, ih, iw, rh, rw, co) -> (n, 2*ih+rh, 2*iw+rw, co)
    y = z[:M, :4 * Cout].reshape(N, H, W_, 2, 2, Cout)
    return jnp.transpose(y, (0, 1, 3, 2, 4, 5)).reshape(N, 2 * H, 2 * W_, Cout)


def conv_transpose2d_s1(x, w, b):
    """ConvTranspose2d(k=3, stride=1, padding=1), no BN: equals a stride-1 conv
    with the spatially flipped kernel and padding k-1-p = 1 (bias added)."""
    N, H, W_, Cin = x.shape
    _, Cout, k, _ = w.shape
    xp = jnp.pad(x, ((0, 0), (1, 1), (1, 1), (0, 0)))
    P = _im2col(xp, k, 1, H, W_)
    w_eq = jnp.flip(w, axis=(2, 3))                       # (Cin, Cout, k, k)
    Wm = jnp.transpose(w_eq, (2, 3, 0, 1)).reshape(k * k * Cin, Cout)
    z, M = _linear_bias(P, Wm, b)
    return z[:M, :Cout].reshape(N, H, W_, Cout)


# ----------------------------------------------------------------------------
# Deblur model
# ----------------------------------------------------------------------------
def init_params(key):
    keys = jax.random.split(key, 18)

    def nrm(k, shape, scale=0.1):
        return (scale * jax.random.normal(k, shape)).astype(jnp.float32)

    p = {}
    p["c1_w"] = nrm(keys[0], (8, 3, 3, 3));   p["c1_b"] = nrm(keys[1], (8,))
    p["bn1_g"] = 1.0 + nrm(keys[2], (8,));    p["bn1_b"] = nrm(keys[3], (8,))
    p["c2_w"] = nrm(keys[4], (16, 8, 3, 3));  p["c2_b"] = nrm(keys[5], (16,))
    p["bn2_g"] = 1.0 + nrm(keys[6], (16,));   p["bn2_b"] = nrm(keys[7], (16,))
    p["d1_w"] = nrm(keys[8], (16, 8, 3, 3));  p["d1_b"] = nrm(keys[9], (8,))
    p["bn3_g"] = 1.0 + nrm(keys[10], (8,));   p["bn3_b"] = nrm(keys[11], (8,))
    p["d2_w"] = nrm(keys[12], (8, 4, 3, 3));  p["d2_b"] = nrm(keys[13], (4,))
    p["bn4_g"] = 1.0 + nrm(keys[14], (4,));   p["bn4_b"] = nrm(keys[15], (4,))
    p["d3_w"] = nrm(keys[16], (4, 3, 3, 3));  p["d3_b"] = nrm(keys[17], (3,))
    return p


def deblur_forward(x_nchw, p):
    # NCHW in (PyTorch convention) -> NHWC internally -> NCHW out.
    x = jnp.transpose(x_nchw, (0, 2, 3, 1)).astype(jnp.float32)
    # Conv biases c*_b / d1_b / d2_b are intentionally unused: a bias followed
    # by training-mode BatchNorm is exactly cancelled by the mean subtraction.
    # (This is only valid for training-mode BN with batch statistics.)
    x = conv2d_bn(x, p["c1_w"], p["bn1_g"], p["bn1_b"], stride=2, padding=1)
    x = conv2d_bn(x, p["c2_w"], p["bn2_g"], p["bn2_b"], stride=2, padding=1)
    x = conv_transpose2d_s2_bn(x, p["d1_w"], p["bn3_g"], p["bn3_b"])
    x = conv_transpose2d_s2_bn(x, p["d2_w"], p["bn4_g"], p["bn4_b"])
    x = conv_transpose2d_s1(x, p["d3_w"], p["d3_b"])
    # TODO(synk): BatchNorm running_mean/var buffer updates (a training-time
    # side effect in PyTorch) are not materialized; they do not affect the
    # forward output.
    return jnp.transpose(x, (0, 3, 1, 2))


# ----------------------------------------------------------------------------
# Pure-JAX (XLA) reference for a correctness self-check
# ----------------------------------------------------------------------------
def _ref_forward(x_nchw, p):
    dn = ("NHWC", "HWIO", "NHWC")

    def conv(x, w, b, s, pad):
        y = jax.lax.conv_general_dilated(
            x, jnp.transpose(w, (2, 3, 1, 0)), (s, s),
            [(pad, pad), (pad, pad)], dimension_numbers=dn)
        return y + b

    def convT(x, w, b, s, pad, opad):
        k = w.shape[2]
        w_hwio = jnp.transpose(jnp.flip(w, (2, 3)), (2, 3, 0, 1))
        q = k - 1 - pad
        y = jax.lax.conv_general_dilated(
            x, w_hwio, (1, 1), [(q, q + opad), (q, q + opad)],
            lhs_dilation=(s, s), dimension_numbers=dn)
        return y + b

    def bn(x, g, bb):
        m = x.mean(axis=(0, 1, 2))
        v = ((x - m) ** 2).mean(axis=(0, 1, 2))
        return g * (x - m) * jax.lax.rsqrt(v + EPS) + bb

    x = jnp.transpose(x_nchw, (0, 2, 3, 1)).astype(jnp.float32)
    x = bn(conv(x, p["c1_w"], p["c1_b"], 2, 1), p["bn1_g"], p["bn1_b"])
    x = bn(conv(x, p["c2_w"], p["c2_b"], 2, 1), p["bn2_g"], p["bn2_b"])
    x = bn(convT(x, p["d1_w"], p["d1_b"], 2, 1, 1), p["bn3_g"], p["bn3_b"])
    x = bn(convT(x, p["d2_w"], p["d2_b"], 2, 1, 1), p["bn4_g"], p["bn4_b"])
    x = convT(x, p["d3_w"], p["d3_b"], 1, 1, 0)
    return jnp.transpose(x, (0, 3, 1, 2))


if __name__ == "__main__":
    key = jax.random.PRNGKey(0)
    kx, kp = jax.random.split(key)
    x = jax.random.normal(kx, (2, 3, 16, 16), jnp.float32)   # NCHW, like PyTorch
    params = init_params(kp)

    y = jax.jit(deblur_forward)(x, params)
    jax.block_until_ready(y)
    assert y.shape == (2, 3, 16, 16), y.shape
    assert y.dtype == jnp.float32

    # Self-check against the pure-JAX reference (same math, XLA convs).
    y_ref = jax.jit(_ref_forward)(x, params)
    jax.block_until_ready(y_ref)
    err = float(jnp.max(jnp.abs(y - y_ref)))
    assert err < 1e-3, f"max abs error vs reference: {err}"

    print("KERNEL_OK")
</pallas_src>

<mosaic_0001>
module attributes {stable_mosaic.version = 11 : i64} {
  func.func @_gemm_bn_kernel(%arg0: i32, %arg1: memref<128x27xf32, #tpu.memory_space<vmem>>, %arg2: memref<27x128xf32, #tpu.memory_space<vmem>>, %arg3: memref<128x128xf32, #tpu.memory_space<vmem>>, %arg4: memref<1x128xf32, #tpu.memory_space<vmem>>, %arg5: memref<1x128xf32, #tpu.memory_space<vmem>>, %arg6: memref<128x128xf32, #tpu.memory_space<vmem>>) attributes {dimension_semantics = [#tpu.dimension_semantics<arbitrary>], iteration_bounds = array<i64: 1>, scalar_prefetch = 0 : i64, scratch_operands = 0 : i64, tpu.core_type = #tpu.core_type<tc>, window_params = [{pipeline_mode = #tpu.pipeline_mode<synchronous>, transform_indices = @transform_0, window_bounds = array<i64: 128, 27>}, {pipeline_mode = #tpu.pipeline_mode<synchronous>, transform_indices = @transform_1, window_bounds = array<i64: 27, 128>}, {pipeline_mode = #tpu.pipeline_mode<synchronous>, transform_indices = @transform_2, window_bounds = array<i64: 128, 128>}, {pipeline_mode = #tpu.pipeline_mode<synchronous>, transform_indices = @transform_3, window_bounds = array<i64: 1, 128>}, {pipeline_mode = #tpu.pipeline_mode<synchronous>, transform_indices = @transform_4, window_bounds = array<i64: 1, 128>}, {pipeline_mode = #tpu.pipeline_mode<synchronous>, transform_indices = @transform_5, window_bounds = array<i64: 128, 128>}]} {
    %c0 = arith.constant 0 : index
    %c0_0 = arith.constant 0 : index
    %0 = vector.load %arg1[%c0, %c0_0] : memref<128x27xf32, #tpu.memory_space<vmem>>, vector<128x27xf32>
    %c0_1 = arith.constant 0 : index
    %c0_2 = arith.constant 0 : index
    %1 = vector.load %arg2[%c0_1, %c0_2] : memref<27x128xf32, #tpu.memory_space<vmem>>, vector<27x128xf32>
    %cst = arith.constant dense<0.000000e+00> : vector<128x128xf32>
    %2 = tpu.matmul %0, %1, %cst {dimension_numbers = #tpu.dot_dimension_numbers<[1], [0], [0], [1], [0, 0, 1, 1], [], []>} : vector<128x27xf32>, vector<27x128xf32>, vector<128x128xf32> -> vector<128x128xf32>
    %cst_3 = arith.constant dense<0.000000e+00> : vector<128xf32>
    %3 = vector.multi_reduction <add>, %2, %cst_3 [0] : vector<128x128xf32> to vector<128xf32>
    %4 = vector.shape_cast %3 : vector<128xf32> to vector<1x128xf32>
    %5 = arith.mulf %2, %2 : vector<128x128xf32>
    %cst_4 = arith.constant dense<0.000000e+00> : vector<128xf32>
    %6 = vector.multi_reduction <add>, %5, %cst_4 [0] : vector<128x128xf32> to vector<128xf32>
    %7 = vector.shape_cast %6 : vector<128xf32> to vector<1x128xf32>
    %8 = tpu.iota {dimensions = array<i32: 0>} : vector<8x128xi32>
    %c0_i32 = arith.constant 0 : i32
    %9 = vector.broadcast %c0_i32 : i32 to vector<8x128xi32>
    %10 = arith.cmpi eq, %8, %9 : vector<8x128xi32>
    %11 = vector.shape_cast %4 : vector<1x128xf32> to vector<1x128xf32>
    %12 = vector.broadcast %11 : vector<1x128xf32> to vector<8x128xf32>
    %c1_i32 = arith.constant 1 : i32
    %13 = vector.broadcast %c1_i32 : i32 to vector<8x128xi32>
    %14 = arith.cmpi eq, %8, %13 : vector<8x128xi32>
    %15 = vector.shape_cast %7 : vector<1x128xf32> to vector<1x128xf32>
    %16 = vector.broadcast %15 : vector<1x128xf32> to vector<8x128xf32>
    %cst_5 = arith.constant 0.000000e+00 : f32
    %17 = vector.broadcast %cst_5 : f32 to vector<8x128xf32>
    %18 = arith.select %14, %16, %17 : vector<8x128xi1>, vector<8x128xf32>
    %19 = arith.select %10, %12, %18 : vector<8x128xi1>, vector<8x128xf32>
    %c0_6 = arith.constant 0 : index
    %c0_7 = arith.constant 0 : index
    %20 = vector.load %arg3[%c0_6, %c0_7] : memref<128x128xf32, #tpu.memory_space<vmem>>, vector<128x128xf32>
    %cst_8 = arith.constant dense<0.000000e+00> : vector<8x128xf32>
    %21 = tpu.matmul %19, %20, %cst_8 {dimension_numbers = #tpu.dot_dimension_numbers<[1], [0], [0], [1], [0, 0, 1, 1], [], []>} : vector<8x128xf32>, vector<128x128xf32>, vector<8x128xf32> -> vector<8x128xf32>
    %22 = vector.extract_strided_slice %21 {offsets = [0, 0], sizes = [1, 128], strides = [1, 1]} : vector<8x128xf32> to vector<1x128xf32>
    %23 = vector.extract_strided_slice %21 {offsets = [1, 0], sizes = [1, 128], strides = [1, 1]} : vector<8x128xf32> to vector<1x128xf32>
    %24 = arith.mulf %22, %22 : vector<1x128xf32>
    %25 = arith.subf %23, %24 : vector<1x128xf32>
    %c0_9 = arith.constant 0 : index
    %c0_10 = arith.constant 0 : index
    %26 = vector.load %arg4[%c0_9, %c0_10] : memref<1x128xf32, #tpu.memory_space<vmem>>, vector<1x128xf32>
    %cst_11 = arith.constant 9.99999974E-6 : f32
    %27 = vector.broadcast %cst_11 : f32 to vector<1x128xf32>
    %28 = arith.addf %25, %27 : vector<1x128xf32>
    %29 = math.rsqrt %28 : vector<1x128xf32>
    %30 = arith.mulf %26, %29 : vector<1x128xf32>
    %c0_12 = arith.constant 0 : index
    %c0_13 = arith.constant 0 : index
    %31 = vector.load %arg5[%c0_12, %c0_13] : memref<1x128xf32, #tpu.memory_space<vmem>>, vector<1x128xf32>
    %32 = arith.mulf %22, %30 : vector<1x128xf32>
    %33 = arith.subf %31, %32 : vector<1x128xf32>
    %34 = vector.broadcast %30 : vector<1x128xf32> to vector<128x128xf32>
    %35 = arith.mulf %2, %34 : vector<128x128xf32>
    %36 = vector.broadcast %33 : vector<1x128xf32> to vector<128x128xf32>
    %37 = arith.addf %35, %36 : vector<128x128xf32>
    %c0_14 = arith.constant 0 : index
    %c0_15 = arith.constant 0 : index
    %38 = vector.load %arg6[%c0_14, %c0_15] : memref<128x128xf32, #tpu.memory_space<vmem>>, vector<128x128xf32>
    tpu.vector_store %arg6[%c0_14, %c0_15], %37 {strides = array<i32>} : memref<128x128xf32, #tpu.memory_space<vmem>>, vector<128x128xf32>,
    return
  }
  func.func @transform_0(%arg0: i32) -> (i32, i32) {
    %c0_i32 = arith.constant 0 : i32
    %c0_i32_0 = arith.constant 0 : i32
    %c0_i32_1 = arith.constant 0 : i32
    return %c0_i32, %c0_i32_0 : i32, i32
  }
  func.func @transform_1(%arg0: i32) -> (i32, i32) {
    %c0_i32 = arith.constant 0 : i32
    %c0_i32_0 = arith.constant 0 : i32
    %c0_i32_1 = arith.constant 0 : i32
    return %c0_i32, %c0_i32_0 : i32, i32
  }
  func.func @transform_2(%arg0: i32) -> (i32, i32) {
    %c0_i32 = arith.constant 0 : i32
    %c0_i32_0 = arith.constant 0 : i32
    %c0_i32_1 = arith.constant 0 : i32
    return %c0_i32, %c0_i32_0 : i32, i32
  }
  func.func @transform_3(%arg0: i32) -> (i32, i32) {
    %c0_i32 = arith.constant 0 : i32
    %c0_i32_0 = arith.constant 0 : i32
    %c0_i32_1 = arith.constant 0 : i32
    return %c0_i32, %c0_i32_0 : i32, i32
  }
  func.func @transform_4(%arg0: i32) -> (i32, i32) {
    %c0_i32 = arith.constant 0 : i32
    %c0_i32_0 = arith.constant 0 : i32
    %c0_i32_1 = arith.constant 0 : i32
    return %c0_i32, %c0_i32_0 : i32, i32
  }
  func.func @transform_5(%arg0: i32) -> (i32, i32) {
    %c0_i32 = arith.constant 0 : i32
    %c0_i32_0 = arith.constant 0 : i32
    %c0_i32_1 = arith.constant 0 : i32
    return %c0_i32, %c0_i32_0 : i32, i32
  }
}

module attributes {stable_mosaic.version = 11 : i64} {
  func.func @_gemm_bn_kernel(%arg0: i32, %arg1: memref<32x72xf32, #tpu.memory_space<vmem>>, %arg2: memref<72x128xf32, #tpu.memory_space<vmem>>, %arg3: memref<128x128xf32, #tpu.memory_space<vmem>>, %arg4: memref<1x128xf32, #tpu.memory_space<vmem>>, %arg5: memref<1x128xf32, #tpu.memory_space<vmem>>, %arg6: memref<32x128xf32, #tpu.memory_space<vmem>>) attributes {dimension_semantics = [#tpu.dimension_semantics<arbitrary>], iteration_bounds = array<i64: 1>, scalar_prefetch = 0 : i64, scratch_operands = 0 : i64, tpu.core_type = #tpu.core_type<tc>, window_params = [{pipeline_mode = #tpu.pipeline_mode<synchronous>, transform_indices = @transform_0, window_bounds = array<i64: 32, 72>}, {pipeline_mode = #tpu.pipeline_mode<synchronous>, transform_indices = @transform_1, window_bounds = array<i64: 72, 128>}, {pipeline_mode = #tpu.pipeline_mode<synchronous>, transform_indices = @transform_2, window_bounds = array<i64: 128, 128>}, {pipeline_mode = #tpu.pipeline_mode<synchronous>, transform_indices = @transform_3, window_bounds = array<i64: 1, 128>}, {pipeline_mode = #tpu.pipeline_mode<synchronous>, transform_indices = @transform_4, window_bounds = array<i64: 1, 128>}, {pipeline_mode = #tpu.pipeline_mode<synchronous>, transform_indices = @transform_5, window_bounds = array<i64: 32, 128>}]} {
    %c0 = arith.constant 0 : index
    %c0_0 = arith.constant 0 : index
    %0 = vector.load %arg1[%c0, %c0_0] : memref<32x72xf32, #tpu.memory_space<vmem>>, vector<32x72xf32>
    %c0_1 = arith.constant 0 : index
    %c0_2 = arith.constant 0 : index
    %1 = vector.load %arg2[%c0_1, %c0_2] : memref<72x128xf32, #tpu.memory_space<vmem>>, vector<72x128xf32>
    %cst = arith.constant dense<0.000000e+00> : vector<32x128xf32>
    %2 = tpu.matmul %0, %1, %cst {dimension_numbers = #tpu.dot_dimension_numbers<[1], [0], [0], [1], [0, 0, 1, 1], [], []>} : vector<32x72xf32>, vector<72x128xf32>, vector<32x128xf32> -> vector<32x128xf32>
    %cst_3 = arith.constant dense<0.000000e+00> : vector<128xf32>
    %3 = vector.multi_reduction <add>, %2, %cst_3 [0] : vector<32x128xf32> to vector<128xf32>
    %4 = vector.shape_cast %3 : vector<128xf32> to vector<1x128xf32>
    %5 = arith.mulf %2, %2 : vector<32x128xf32>
    %cst_4 = arith.constant dense<0.000000e+00> : vector<128xf32>
    %6 = vector.multi_reduction <add>, %5, %cst_4 [0] : vector<32x128xf32> to vector<128xf32>
    %7 = vector.shape_cast %6 : vector<128xf32> to vector<1x128xf32>
    %8 = tpu.iota {dimensions = array<i32: 0>} : vector<8x128xi32>
    %c0_i32 = arith.constant 0 : i32
    %9 = vector.broadcast %c0_i32 : i32 to vector<8x128xi32>
    %10 = arith.cmpi eq, %8, %9 : vector<8x128xi32>
    %11 = vector.shape_cast %4 : vector<1x128xf32> to vector<1x128xf32>
    %12 = vector.broadcast %11 : vector<1x128xf32> to vector<8x128xf32>
    %c1_i32 = arith.constant 1 : i32
    %13 = vector.broadcast %c1_i32 : i32 to vector<8x128xi32>
    %14 = arith.cmpi eq, %8, %13 : vector<8x128xi32>
    %15 = vector.shape_cast %7 : vector<1x128xf32> to vector<1x128xf32>
    %16 = vector.broadcast %15 : vector<1x128xf32> to vector<8x128xf32>
    %cst_5 = arith.constant 0.000000e+00 : f32
    %17 = vector.broadcast %cst_5 : f32 to vector<8x128xf32>
    %18 = arith.select %14, %16, %17 : vector<8x128xi1>, vector<8x128xf32>
    %19 = arith.select %10, %12, %18 : vector<8x128xi1>, vector<8x128xf32>
    %c0_6 = arith.constant 0 : index
    %c0_7 = arith.constant 0 : index
    %20 = vector.load %arg3[%c0_6, %c0_7] : memref<128x128xf32, #tpu.memory_space<vmem>>, vector<128x128xf32>
    %cst_8 = arith.constant dense<0.000000e+00> : vector<8x128xf32>
    %21 = tpu.matmul %19, %20, %cst_8 {dimension_numbers = #tpu.dot_dimension_numbers<[1], [0], [0], [1], [0, 0, 1, 1], [], []>} : vector<8x128xf32>, vector<128x128xf32>, vector<8x128xf32> -> vector<8x128xf32>
    %22 = vector.extract_strided_slice %21 {offsets = [0, 0], sizes = [1, 128], strides = [1, 1]} : vector<8x128xf32> to vector<1x128xf32>
    %23 = vector.extract_strided_slice %21 {offsets = [1, 0], sizes = [1, 128], strides = [1, 1]} : vector<8x128xf32> to vector<1x128xf32>
    %24 = arith.mulf %22, %22 : vector<1x128xf32>
    %25 = arith.subf %23, %24 : vector<1x128xf32>
    %c0_9 = arith.constant 0 : index
    %c0_10 = arith.constant 0 : index
    %26 = vector.load %arg4[%c0_9, %c0_10] : memref<1x128xf32, #tpu.memory_space<vmem>>, vector<1x128xf32>
    %cst_11 = arith.constant 9.99999974E-6 : f32
    %27 = vector.broadcast %cst_11 : f32 to vector<1x128xf32>
    %28 = arith.addf %25, %27 : vector<1x128xf32>
    %29 = math.rsqrt %28 : vector<1x128xf32>
    %30 = arith.mulf %26, %29 : vector<1x128xf32>
    %c0_12 = arith.constant 0 : index
    %c0_13 = arith.constant 0 : index
    %31 = vector.load %arg5[%c0_12, %c0_13] : memref<1x128xf32, #tpu.memory_space<vmem>>, vector<1x128xf32>
    %32 = arith.mulf %22, %30 : vector<1x128xf32>
    %33 = arith.subf %31, %32 : vector<1x128xf32>
    %34 = vector.broadcast %30 : vector<1x128xf32> to vector<32x128xf32>
    %35 = arith.mulf %2, %34 : vector<32x128xf32>
    %36 = vector.broadcast %33 : vector<1x128xf32> to vector<32x128xf32>
    %37 = arith.addf %35, %36 : vector<32x128xf32>
    %c0_14 = arith.constant 0 : index
    %c0_15 = arith.constant 0 : index
    %38 = vector.load %arg6[%c0_14, %c0_15] : memref<32x128xf32, #tpu.memory_space<vmem>>, vector<32x128xf32>
    tpu.vector_store %arg6[%c0_14, %c0_15], %37 {strides = array<i32>} : memref<32x128xf32, #tpu.memory_space<vmem>>, vector<32x128xf32>,
    return
  }
  func.func @transform_0(%arg0: i32) -> (i32, i32) {
    %c0_i32 = arith.constant 0 : i32
    %c0_i32_0 = arith.constant 0 : i32
    %c0_i32_1 = arith.constant 0 : i32
    return %c0_i32, %c0_i32_0 : i32, i32
  }
  func.func @transform_1(%arg0: i32) -> (i32, i32) {
    %c0_i32 = arith.constant 0 : i32
    %c0_i32_0 = arith.constant 0 : i32
    %c0_i32_1 = arith.constant 0 : i32
    return %c0_i32, %c0_i32_0 : i32, i32
  }
  func.func @transform_2(%arg0: i32) -> (i32, i32) {
    %c0_i32 = arith.constant 0 : i32
    %c0_i32_0 = arith.constant 0 : i32
    %c0_i32_1 = arith.constant 0 : i32
    return %c0_i32, %c0_i32_0 : i32, i32
  }
  func.func @transform_3(%arg0: i32) -> (i32, i32) {
    %c0_i32 = arith.constant 0 : i32
    %c0_i32_0 = arith.constant 0 : i32
    %c0_i32_1 = arith.constant 0 : i32
    return %c0_i32, %c0_i32_0 : i32, i32
  }
  func.func @transform_4(%arg0: i32) -> (i32, i32) {
    %c0_i32 = arith.constant 0 : i32
    %c0_i32_0 = arith.constant 0 : i32
    %c0_i32_1 = arith.constant 0 : i32
    return %c0_i32, %c0_i32_0 : i32, i32
  }
  func.func @transform_5(%arg0: i32) -> (i32, i32) {
    %c0_i32 = arith.constant 0 : i32
    %c0_i32_0 = arith.constant 0 : i32
    %c0_i32_1 = arith.constant 0 : i32
    return %c0_i32, %c0_i32_0 : i32, i32
  }
}

module attributes {stable_mosaic.version = 11 : i64} {
  func.func @_gemm_bn_kernel(%arg0: i32, %arg1: memref<32x64xf32, #tpu.memory_space<vmem>>, %arg2: memref<64x128xf32, #tpu.memory_space<vmem>>, %arg3: memref<128x128xf32, #tpu.memory_space<vmem>>, %arg4: memref<1x128xf32, #tpu.memory_space<vmem>>, %arg5: memref<1x128xf32, #tpu.memory_space<vmem>>, %arg6: memref<32x128xf32, #tpu.memory_space<vmem>>) attributes {dimension_semantics = [#tpu.dimension_semantics<arbitrary>], iteration_bounds = array<i64: 1>, scalar_prefetch = 0 : i64, scratch_operands = 0 : i64, tpu.core_type = #tpu.core_type<tc>, window_params = [{pipeline_mode = #tpu.pipeline_mode<synchronous>, transform_indices = @transform_0, window_bounds = array<i64: 32, 64>}, {pipeline_mode = #tpu.pipeline_mode<synchronous>, transform_indices = @transform_1, window_bounds = array<i64: 64, 128>}, {pipeline_mode = #tpu.pipeline_mode<synchronous>, transform_indices = @transform_2, window_bounds = array<i64: 128, 128>}, {pipeline_mode = #tpu.pipeline_mode<synchronous>, transform_indices = @transform_3, window_bounds = array<i64: 1, 128>}, {pipeline_mode = #tpu.pipeline_mode<synchronous>, transform_indices = @transform_4, window_bounds = array<i64: 1, 128>}, {pipeline_mode = #tpu.pipeline_mode<synchronous>, transform_indices = @transform_5, window_bounds = array<i64: 32, 128>}]} {
    %c0 = arith.constant 0 : index
    %c0_0 = arith.constant 0 : index
    %0 = vector.load %arg1[%c0, %c0_0] : memref<32x64xf32, #tpu.memory_space<vmem>>, vector<32x64xf32>
    %c0_1 = arith.constant 0 : index
    %c0_2 = arith.constant 0 : index
    %1 = vector.load %arg2[%c0_1, %c0_2] : memref<64x128xf32, #tpu.memory_space<vmem>>, vector<64x128xf32>
    %cst = arith.constant dense<0.000000e+00> : vector<32x128xf32>
    %2 = tpu.matmul %0, %1, %cst {dimension_numbers = #tpu.dot_dimension_numbers<[1], [0], [0], [1], [0, 0, 1, 1], [], []>} : vector<32x64xf32>, vector<64x128xf32>, vector<32x128xf32> -> vector<32x128xf32>
    %cst_3 = arith.constant dense<0.000000e+00> : vector<128xf32>
    %3 = vector.multi_reduction <add>, %2, %cst_3 [0] : vector<32x128xf32> to vector<128xf32>
    %4 = vector.shape_cast %3 : vector<128xf32> to vector<1x128xf32>
    %5 = arith.mulf %2, %2 : vector<32x128xf32>
    %cst_4 = arith.constant dense<0.000000e+00> : vector<128xf32>
    %6 = vector.multi_reduction <add>, %5, %cst_4 [0] : vector<32x128xf32> to vector<128xf32>
    %7 = vector.shape_cast %6 : vector<128xf32> to vector<1x128xf32>
    %8 = tpu.iota {dimensions = array<i32: 0>} : vector<8x128xi32>
    %c0_i32 = arith.constant 0 : i32
    %9 = vector.broadcast %c0_i32 : i32 to vector<8x128xi32>
    %10 = arith.cmpi eq, %8, %9 : vector<8x128xi32>
    %11 = vector.shape_cast %4 : vector<1x128xf32> to vector<1x128xf32>
    %12 = vector.broadcast %11 : vector<1x128xf32> to vector<8x128xf32>
    %c1_i32 = arith.constant 1 : i32
    %13 = vector.broadcast %c1_i32 : i32 to vector<8x128xi32>
    %14 = arith.cmpi eq, %8, %13 : vector<8x128xi32>
    %15 = vector.shape_cast %7 : vector<1x128xf32> to vector<1x128xf32>
    %16 = vector.broadcast %15 : vector<1x128xf32> to vector<8x128xf32>
    %cst_5 = arith.constant 0.000000e+00 : f32
    %17 = vector.broadcast %cst_5 : f32 to vector<8x128xf32>
    %18 = arith.select %14, %16, %17 : vector<8x128xi1>, vector<8x128xf32>
    %19 = arith.select %10, %12, %18 : vector<8x128xi1>, vector<8x128xf32>
    %c0_6 = arith.constant 0 : index
    %c0_7 = arith.constant 0 : index
    %20 = vector.load %arg3[%c0_6, %c0_7] : memref<128x128xf32, #tpu.memory_space<vmem>>, vector<128x128xf32>
    %cst_8 = arith.constant dense<0.000000e+00> : vector<8x128xf32>
    %21 = tpu.matmul %19, %20, %cst_8 {dimension_numbers = #tpu.dot_dimension_numbers<[1], [0], [0], [1], [0, 0, 1, 1], [], []>} : vector<8x128xf32>, vector<128x128xf32>, vector<8x128xf32> -> vector<8x128xf32>
    %22 = vector.extract_strided_slice %21 {offsets = [0, 0], sizes = [1, 128], strides = [1, 1]} : vector<8x128xf32> to vector<1x128xf32>
    %23 = vector.extract_strided_slice %21 {offsets = [1, 0], sizes = [1, 128], strides = [1, 1]} : vector<8x128xf32> to vector<1x128xf32>
    %24 = arith.mulf %22, %22 : vector<1x128xf32>
    %25 = arith.subf %23, %24 : vector<1x128xf32>
    %c0_9 = arith.constant 0 : index
    %c0_10 = arith.constant 0 : index
    %26 = vector.load %arg4[%c0_9, %c0_10] : memref<1x128xf32, #tpu.memory_space<vmem>>, vector<1x128xf32>
    %cst_11 = arith.constant 9.99999974E-6 : f32
    %27 = vector.broadcast %cst_11 : f32 to vector<1x128xf32>
    %28 = arith.addf %25, %27 : vector<1x128xf32>
    %29 = math.rsqrt %28 : vector<1x128xf32>
    %30 = arith.mulf %26, %29 : vector<1x128xf32>
    %c0_12 = arith.constant 0 : index
    %c0_13 = arith.constant 0 : index
    %31 = vector.load %arg5[%c0_12, %c0_13] : memref<1x128xf32, #tpu.memory_space<vmem>>, vector<1x128xf32>
    %32 = arith.mulf %22, %30 : vector<1x128xf32>
    %33 = arith.subf %31, %32 : vector<1x128xf32>
    %34 = vector.broadcast %30 : vector<1x128xf32> to vector<32x128xf32>
    %35 = arith.mulf %2, %34 : vector<32x128xf32>
    %36 = vector.broadcast %33 : vector<1x128xf32> to vector<32x128xf32>
    %37 = arith.addf %35, %36 : vector<32x128xf32>
    %c0_14 = arith.constant 0 : index
    %c0_15 = arith.constant 0 : index
    %38 = vector.load %arg6[%c0_14, %c0_15] : memref<32x128xf32, #tpu.memory_space<vmem>>, vector<32x128xf32>
    tpu.vector_store %arg6[%c0_14, %c0_15], %37 {strides = array<i32>} : memref<32x128xf32, #tpu.memory_space<vmem>>, vector<32x128xf32>,
    return
  }
  func.func @transform_0(%arg0: i32) -> (i32, i32) {
    %c0_i32 = arith.constant 0 : i32
    %c0_i32_0 = arith.constant 0 : i32
    %c0_i32_1 = arith.constant 0 : i32
    return %c0_i32, %c0_i32_0 : i32, i32
  }
  func.func @transform_1(%arg0: i32) -> (i32, i32) {
    %c0_i32 = arith.constant 0 : i32
    %c0_i32_0 = arith.constant 0 : i32
    %c0_i32_1 = arith.constant 0 : i32
    return %c0_i32, %c0_i32_0 : i32, i32
  }
  func.func @transform_2(%arg0: i32) -> (i32, i32) {
    %c0_i32 = arith.constant 0 : i32
    %c0_i32_0 = arith.constant 0 : i32
    %c0_i32_1 = arith.constant 0 : i32
    return %c0_i32, %c0_i32_0 : i32, i32
  }
  func.func @transform_3(%arg0: i32) -> (i32, i32) {
    %c0_i32 = arith.constant 0 : i32
    %c0_i32_0 = arith.constant 0 : i32
    %c0_i32_1 = arith.constant 0 : i32
    return %c0_i32, %c0_i32_0 : i32, i32
  }
  func.func @transform_4(%arg0: i32) -> (i32, i32) {
    %c0_i32 = arith.constant 0 : i32
    %c0_i32_0 = arith.constant 0 : i32
    %c0_i32_1 = arith.constant 0 : i32
    return %c0_i32, %c0_i32_0 : i32, i32
  }
  func.func @transform_5(%arg0: i32) -> (i32, i32) {
    %c0_i32 = arith.constant 0 : i32
    %c0_i32_0 = arith.constant 0 : i32
    %c0_i32_1 = arith.constant 0 : i32
    return %c0_i32, %c0_i32_0 : i32, i32
  }
}

module attributes {stable_mosaic.version = 11 : i64} {
  func.func @_gemm_bn_kernel(%arg0: i32, %arg1: memref<128x32xf32, #tpu.memory_space<vmem>>, %arg2: memref<32x128xf32, #tpu.memory_space<vmem>>, %arg3: memref<128x128xf32, #tpu.memory_space<vmem>>, %arg4: memref<1x128xf32, #tpu.memory_space<vmem>>, %arg5: memref<1x128xf32, #tpu.memory_space<vmem>>, %arg6: memref<128x128xf32, #tpu.memory_space<vmem>>) attributes {dimension_semantics = [#tpu.dimension_semantics<arbitrary>], iteration_bounds = array<i64: 1>, scalar_prefetch = 0 : i64, scratch_operands = 0 : i64, tpu.core_type = #tpu.core_type<tc>, window_params = [{pipeline_mode = #tpu.pipeline_mode<synchronous>, transform_indices = @transform_0, window_bounds = array<i64: 128, 32>}, {pipeline_mode = #tpu.pipeline_mode<synchronous>, transform_indices = @transform_1, window_bounds = array<i64: 32, 128>}, {pipeline_mode = #tpu.pipeline_mode<synchronous>, transform_indices = @transform_2, window_bounds = array<i64: 128, 128>}, {pipeline_mode = #tpu.pipeline_mode<synchronous>, transform_indices = @transform_3, window_bounds = array<i64: 1, 128>}, {pipeline_mode = #tpu.pipeline_mode<synchronous>, transform_indices = @transform_4, window_bounds = array<i64: 1, 128>}, {pipeline_mode = #tpu.pipeline_mode<synchronous>, transform_indices = @transform_5, window_bounds = array<i64: 128, 128>}]} {
    %c0 = arith.constant 0 : index
    %c0_0 = arith.constant 0 : index
    %0 = vector.load %arg1[%c0, %c0_0] : memref<128x32xf32, #tpu.memory_space<vmem>>, vector<128x32xf32>
    %c0_1 = arith.constant 0 : index
    %c0_2 = arith.constant 0 : index
    %1 = vector.load %arg2[%c0_1, %c0_2] : memref<32x128xf32, #tpu.memory_space<vmem>>, vector<32x128xf32>
    %cst = arith.constant dense<0.000000e+00> : vector<128x128xf32>
    %2 = tpu.matmul %0, %1, %cst {dimension_numbers = #tpu.dot_dimension_numbers<[1], [0], [0], [1], [0, 0, 1, 1], [], []>} : vector<128x32xf32>, vector<32x128xf32>, vector<128x128xf32> -> vector<128x128xf32>
    %cst_3 = arith.constant dense<0.000000e+00> : vector<128xf32>
    %3 = vector.multi_reduction <add>, %2, %cst_3 [0] : vector<128x128xf32> to vector<128xf32>
    %4 = vector.shape_cast %3 : vector<128xf32> to vector<1x128xf32>
    %5 = arith.mulf %2, %2 : vector<128x128xf32>
    %cst_4 = arith.constant dense<0.000000e+00> : vector<128xf32>
    %6 = vector.multi_reduction <add>, %5, %cst_4 [0] : vector<128x128xf32> to vector<128xf32>
    %7 = vector.shape_cast %6 : vector<128xf32> to vector<1x128xf32>
    %8 = tpu.iota {dimensions = array<i32: 0>} : vector<8x128xi32>
    %c0_i32 = arith.constant 0 : i32
    %9 = vector.broadcast %c0_i32 : i32 to vector<8x128xi32>
    %10 = arith.cmpi eq, %8, %9 : vector<8x128xi32>
    %11 = vector.shape_cast %4 : vector<1x128xf32> to vector<1x128xf32>
    %12 = vector.broadcast %11 : vector<1x128xf32> to vector<8x128xf32>
    %c1_i32 = arith.constant 1 : i32
    %13 = vector.broadcast %c1_i32 : i32 to vector<8x128xi32>
    %14 = arith.cmpi eq, %8, %13 : vector<8x128xi32>
    %15 = vector.shape_cast %7 : vector<1x128xf32> to vector<1x128xf32>
    %16 = vector.broadcast %15 : vector<1x128xf32> to vector<8x128xf32>
    %cst_5 = arith.constant 0.000000e+00 : f32
    %17 = vector.broadcast %cst_5 : f32 to vector<8x128xf32>
    %18 = arith.select %14, %16, %17 : vector<8x128xi1>, vector<8x128xf32>
    %19 = arith.select %10, %12, %18 : vector<8x128xi1>, vector<8x128xf32>
    %c0_6 = arith.constant 0 : index
    %c0_7 = arith.constant 0 : index
    %20 = vector.load %arg3[%c0_6, %c0_7] : memref<128x128xf32, #tpu.memory_space<vmem>>, vector<128x128xf32>
    %cst_8 = arith.constant dense<0.000000e+00> : vector<8x128xf32>
    %21 = tpu.matmul %19, %20, %cst_8 {dimension_numbers = #tpu.dot_dimension_numbers<[1], [0], [0], [1], [0, 0, 1, 1], [], []>} : vector<8x128xf32>, vector<128x128xf32>, vector<8x128xf32> -> vector<8x128xf32>
    %22 = vector.extract_strided_slice %21 {offsets = [0, 0], sizes = [1, 128], strides = [1, 1]} : vector<8x128xf32> to vector<1x128xf32>
    %23 = vector.extract_strided_slice %21 {offsets = [1, 0], sizes = [1, 128], strides = [1, 1]} : vector<8x128xf32> to vector<1x128xf32>
    %24 = arith.mulf %22, %22 : vector<1x128xf32>
    %25 = arith.subf %23, %24 : vector<1x128xf32>
    %c0_9 = arith.constant 0 : index
    %c0_10 = arith.constant 0 : index
    %26 = vector.load %arg4[%c0_9, %c0_10] : memref<1x128xf32, #tpu.memory_space<vmem>>, vector<1x128xf32>
    %cst_11 = arith.constant 9.99999974E-6 : f32
    %27 = vector.broadcast %cst_11 : f32 to vector<1x128xf32>
    %28 = arith.addf %25, %27 : vector<1x128xf32>
    %29 = math.rsqrt %28 : vector<1x128xf32>
    %30 = arith.mulf %26, %29 : vector<1x128xf32>
    %c0_12 = arith.constant 0 : index
    %c0_13 = arith.constant 0 : index
    %31 = vector.load %arg5[%c0_12, %c0_13] : memref<1x128xf32, #tpu.memory_space<vmem>>, vector<1x128xf32>
    %32 = arith.mulf %22, %30 : vector<1x128xf32>
    %33 = arith.subf %31, %32 : vector<1x128xf32>
    %34 = vector.broadcast %30 : vector<1x128xf32> to vector<128x128xf32>
    %35 = arith.mulf %2, %34 : vector<128x128xf32>
    %36 = vector.broadcast %33 : vector<1x128xf32> to vector<128x128xf32>
    %37 = arith.addf %35, %36 : vector<128x128xf32>
    %c0_14 = arith.constant 0 : index
    %c0_15 = arith.constant 0 : index
    %38 = vector.load %arg6[%c0_14, %c0_15] : memref<128x128xf32, #tpu.memory_space<vmem>>, vector<128x128xf32>
    tpu.vector_store %arg6[%c0_14, %c0_15], %37 {strides = array<i32>} : memref<128x128xf32, #tpu.memory_space<vmem>>, vector<128x128xf32>,
    return
  }
  func.func @transform_0(%arg0: i32) -> (i32, i32) {
    %c0_i32 = arith.constant 0 : i32
    %c0_i32_0 = arith.constant 0 : i32
    %c0_i32_1 = arith.constant 0 : i32
    return %c0_i32, %c0_i32_0 : i32, i32
  }
  func.func @transform_1(%arg0: i32) -> (i32, i32) {
    %c0_i32 = arith.constant 0 : i32
    %c0_i32_0 = arith.constant 0 : i32
    %c0_i32_1 = arith.constant 0 : i32
    return %c0_i32, %c0_i32_0 : i32, i32
  }
  func.func @transform_2(%arg0: i32) -> (i32, i32) {
    %c0_i32 = arith.constant 0 : i32
    %c0_i32_0 = arith.constant 0 : i32
    %c0_i32_1 = arith.constant 0 : i32
    return %c0_i32, %c0_i32_0 : i32, i32
  }
  func.func @transform_3(%arg0: i32) -> (i32, i32) {
    %c0_i32 = arith.constant 0 : i32
    %c0_i32_0 = arith.constant 0 : i32
    %c0_i32_1 = arith.constant 0 : i32
    return %c0_i32, %c0_i32_0 : i32, i32
  }
  func.func @transform_4(%arg0: i32) -> (i32, i32) {
    %c0_i32 = arith.constant 0 : i32
    %c0_i32_0 = arith.constant 0 : i32
    %c0_i32_1 = arith.constant 0 : i32
    return %c0_i32, %c0_i32_0 : i32, i32
  }
  func.func @transform_5(%arg0: i32) -> (i32, i32) {
    %c0_i32 = arith.constant 0 : i32
    %c0_i32_0 = arith.constant 0 : i32
    %c0_i32_1 = arith.constant 0 : i32
    return %c0_i32, %c0_i32_0 : i32, i32
  }
}

module attributes {stable_mosaic.version = 11 : i64} {
  func.func @_gemm_bias_kernel(%arg0: i32, %arg1: memref<512x36xf32, #tpu.memory_space<vmem>>, %arg2: memref<36x128xf32, #tpu.memory_space<vmem>>, %arg3: memref<1x128xf32, #tpu.memory_space<vmem>>, %arg4: memref<512x128xf32, #tpu.memory_space<vmem>>) attributes {dimension_semantics = [#tpu.dimension_semantics<parallel>], iteration_bounds = array<i64: 1>, scalar_prefetch = 0 : i64, scratch_operands = 0 : i64, tpu.core_type = #tpu.core_type<tc>, window_params = [{transform_indices = @transform_0, window_bounds = array<i64: 512, 36>}, {pipeline_mode = #tpu.pipeline_mode<synchronous>, transform_indices = @transform_1, window_bounds = array<i64: 36, 128>}, {pipeline_mode = #tpu.pipeline_mode<synchronous>, transform_indices = @transform_2, window_bounds = array<i64: 1, 128>}, {transform_indices = @transform_3, window_bounds = array<i64: 512, 128>}]} {
    %c0 = arith.constant 0 : index
    %c0_0 = arith.constant 0 : index
    %0 = vector.load %arg1[%c0, %c0_0] : memref<512x36xf32, #tpu.memory_space<vmem>>, vector<512x36xf32>
    %c0_1 = arith.constant 0 : index
    %c0_2 = arith.constant 0 : index
    %1 = vector.load %arg2[%c0_1, %c0_2] : memref<36x128xf32, #tpu.memory_space<vmem>>, vector<36x128xf32>
    %cst = arith.constant dense<0.000000e+00> : vector<512x128xf32>
    %2 = tpu.matmul %0, %1, %cst {dimension_numbers = #tpu.dot_dimension_numbers<[1], [0], [0], [1], [0, 0, 1, 1], [], []>} : vector<512x36xf32>, vector<36x128xf32>, vector<512x128xf32> -> vector<512x128xf32>
    %c0_3 = arith.constant 0 : index
    %c0_4 = arith.constant 0 : index
    %3 = vector.load %arg3[%c0_3, %c0_4] : memref<1x128xf32, #tpu.memory_space<vmem>>, vector<1x128xf32>
    %4 = vector.broadcast %3 : vector<1x128xf32> to vector<512x128xf32>
    %5 = arith.addf %2, %4 : vector<512x128xf32>
    %c0_5 = arith.constant 0 : index
    %c0_6 = arith.constant 0 : index
    %6 = vector.load %arg4[%c0_5, %c0_6] : memref<512x128xf32, #tpu.memory_space<vmem>>, vector<512x128xf32>
    tpu.vector_store %arg4[%c0_5, %c0_6], %5 {strides = array<i32>} : memref<512x128xf32, #tpu.memory_space<vmem>>, vector<512x128xf32>,
    return
  }
  func.func @transform_0(%arg0: i32) -> (i32, i32) {
    %c0_i32 = arith.constant 0 : i32
    %c0_i32_0 = arith.constant 0 : i32
    return %arg0, %c0_i32 : i32, i32
  }
  func.func @transform_1(%arg0: i32) -> (i32, i32) {
    %c0_i32 = arith.constant 0 : i32
    %c0_i32_0 = arith.constant 0 : i32
    %c0_i32_1 = arith.constant 0 : i32
    return %c0_i32, %c0_i32_0 : i32, i32
  }
  func.func @transform_2(%arg0: i32) -> (i32, i32) {
    %c0_i32 = arith.constant 0 : i32
    %c0_i32_0 = arith.constant 0 : i32
    %c0_i32_1 = arith.constant 0 : i32
    return %c0_i32, %c0_i32_0 : i32, i32
  }
  func.func @transform_3(%arg0: i32) -> (i32, i32) {
    %c0_i32 = arith.constant 0 : i32
    %c0_i32_0 = arith.constant 0 : i32
    return %arg0, %c0_i32 : i32, i32
  }
}

</mosaic_0001>

<llo_original>
// kernel: deblur_forward.6
$region0: #{deblur_forward.6}
  #allocation0 [shape = 'u32[]', space=smem, size = 0x4, offset = 0x4, fixed_abs, tag = 'smem constant byte address 0x4 - core index']
  #allocation1 [shape = 'u32[144,128]{1,0:T(1,128)}', space=vmem, size = 0x12000, scoped, tag = 'internal scratch']
  %s0 = inlined_call_operand.vmem [shape: f32[32,72], index: 0, kind: input, shape index: {}]
  %s1 = inlined_call_operand.vmem [shape: f32[72,128], index: 1, kind: input, shape index: {}]
  %s2 = inlined_call_operand.vmem [shape: f32[128,128], index: 2, kind: input, shape index: {}]
  %s3 = inlined_call_operand.vmem [shape: f32[1,128], index: 3, kind: input, shape index: {}]
  %s4 = inlined_call_operand.vmem [shape: f32[1,128], index: 4, kind: input, shape index: {}]
  %s5 = inlined_call_operand.vmem [shape: f32[32,128], index: 5, kind: output, shape index: {}]
  %s6 = sld [smem:[#allocation0]]
  $region30: #{deblur_forward.6} parent=0
    _
  %s8 = ssub.s32 1, %s6
  %s9 = scalar_select 0, %s8, %s6
  // Predicated region
  $region2: #{deblur_forward.6} parent=0 // pred_check
    _
  $region3: #{deblur_forward.6} parent=0 // pred_check_branch
    %11 = sbr.rel (0) target = $region5
  $region4: #{deblur_forward.6} parent=0 // pred_region
    _
  $region5: #{deblur_forward.6} parent=0 // pred_fallthru
    _
  // Predicated region
  $region6: #{deblur_forward.6} parent=0 // pred_check
    _
  $region7: #{deblur_forward.6} parent=0 // pred_check_branch
    %13 = sbr.rel (0) target = $region9
  $region8: #{deblur_forward.6} parent=0 // pred_region
    _
  $region9: #{deblur_forward.6} parent=0 // pred_fallthru
    _
  // Predicated region
  $region10: #{deblur_forward.6} parent=0 // pred_check
    _
  $region11: #{deblur_forward.6} parent=0 // pred_check_branch
    %15 = sbr.rel (0) target = $region13
  $region12: #{deblur_forward.6} parent=0 // pred_region
    _
  $region13: #{deblur_forward.6} parent=0 // pred_fallthru
    _
  // Predicated region
  $region14: #{deblur_forward.6} parent=0 // pred_check
    _
  $region15: #{deblur_forward.6} parent=0 // pred_check_branch
    %17 = sbr.rel (0) target = $region17
  $region16: #{deblur_forward.6} parent=0 // pred_region
    _
  $region17: #{deblur_forward.6} parent=0 // pred_fallthru
    _
  // Predicated region
  $region18: #{deblur_forward.6} parent=0 // pred_check
    _
  $region19: #{deblur_forward.6} parent=0 // pred_check_branch
    %19 = sbr.rel (0) target = $region21
  $region20: #{deblur_forward.6} parent=0 // pred_region
    _
  $region21: #{deblur_forward.6} parent=0 // pred_fallthru
    _
  %v20 = vld [vmem:[%s0] sm:$0xff]
  %v21 = vld [vmem:[%s0 + $0x8] sm:$0xff]
  %v22 = vld [vmem:[%s0 + $0x10] sm:$0xff]
  %v23 = vld [vmem:[%s0 + $0x18] sm:$0xff]
  %v24 = vld [vmem:[%s1] sm:$0xff]
  %v25 = vld [vmem:[%s1 + $0x8] sm:$0xff]
  %v26 = vld [vmem:[%s1 + $0x10] sm:$0xff]
  %v27 = vld [vmem:[%s1 + $0x18] sm:$0xff]
  %v28 = vld [vmem:[%s1 + $0x20] sm:$0xff]
  %v29 = vld [vmem:[%s1 + $0x28] sm:$0xff]
  %v30 = vld [vmem:[%s1 + $0x30] sm:$0xff]
  %v31 = vld [vmem:[%s1 + $0x38] sm:$0xff]
  %v32 = vld [vmem:[%s1 + $0x40] sm:$0xff]
  %vm33 = vcmask 588800
  %v35 = vsel %vm33, %v20, 0
  %v38 = vsel %vm33, %v21, 0
  %v41 = vsel %vm33, %v22, 0
  %v44 = vsel %vm33, %v23, 0
  %46 = vmatprep.subr.mxu0 0.0
  %47 = vmatpush1.msra.mxu0 %v24
  %48 = vmatprep.subr.mxu0 0.0
  %49 = vmatpush1.msra.mxu0 %v25
  %50 = vmatprep.subr.mxu0 0.0
  %51 = vmatpush1.msra.mxu0 %v26
  %52 = vmatprep.subr.mxu0 0.0
  %53 = vmatpush1.msra.mxu0 %v27
  %54 = vmatprep.subr.mxu0 0.0
  %55 = vmatpush1.msra.mxu0 %v28
  %56 = vmatprep.subr.mxu0 0.0
  %57 = vmatpush1.msra.mxu0 %v29
  %58 = vmatprep.subr.mxu0 0.0
  %59 = vmatpush1.msra.mxu0 %v30
  %60 = vmatprep.subr.mxu0 0.0
  %61 = vmatpush1.msra.mxu0 %v31
  %62 = vmatprep.subr.mxu0 0.0
  %63 = vmatpush1.msra.mxu0 %v32
  %64 = vmatprep.subr.mxu0 0.0
  %65 = vmatpush1.msra.mxu0 0.0
  %66 = vmatprep.subr.mxu0 0.0
  %67 = vmatpush1.msra.mxu0 0.0
  %68 = vmatprep.subr.mxu0 0.0
  %69 = vmatpush1.msra.mxu0 0.0
  %70 = vmatprep.subr.mxu0 0.0
  %71 = vmatpush1.msra.mxu0 0.0
  %72 = vmatprep.subr.mxu0 0.0
  %73 = vmatpush1.msra.mxu0 0.0
  %74 = vmatprep.subr.mxu0 0.0
  %75 = vmatpush1.msra.mxu0 0.0
  %76 = vmatprep.subr.mxu0 0.0
  %77 = vmatpush1.msra.mxu0 0.0
  %78 = vmatprep.subr.mxu0 0.0
  %79 = vmatpush1.msra.mxu0 0.0
  %80 = vmatprep.subr.mxu0 0.0
  %81 = vmatpush1.msra.mxu0 0.0
  %82 = vmatprep.subr.mxu0 0.0
  %83 = vmatpush1.msra.mxu0 0.0
  %84 = vmatprep.subr.mxu0 0.0
  %85 = vmatpush1.msra.mxu0 0.0
  %86 = vmatprep.subr.mxu0 0.0
  %87 = vmatpush1.msra.mxu0 0.0
  %88 = vmatprep.subr.mxu0 0.0
  %89 = vmatpush1.msra.mxu0 0.0
  %90 = vmatprep.subr.mxu0 0.0
  %91 = vmatpush1.msra.mxu0 0.0
  %92 = vmatprep.subr.mxu0 0.0
  %93 = vmatpush1.msra.mxu0 0.0
  %94 = vmatprep.subr.mxu0 0.0
  %95 = vmatpush1.msra.mxu0 0.0
  %96 = vmatprep.subr.mxu0 0.0
  %97 = vmatpush1.msra.mxu0 0.0
  %98 = vmatprep.subr.mxu0 0.0
  %99 = vmatpush1.msra.mxu0 0.0
  %100 = vmatprep.subr.mxu0 0.0
  %101 = vmatpush1.msra.mxu0 0.0
  %102 = vmatprep.subr.mxu0 0.0
  %103 = vmatpush1.msra.mxu0 0.0
  %104 = vmatprep.subr.mxu0 0.0
  %105 = vmatpush1.msra.mxu0 0.0
  %106 = vmatprep.subr.mxu0 0.0
  %107 = vmatpush1.msra.mxu0 0.0
  %108 = vmatprep.subr.mxu0 0.0
  %109 = vmatpush1.msra.mxu0 0.0
  %110 = vmatprep.mubr.f32.mxu0 0.0
  %111 = vmatmul.mubr.f32.gmra.mrb[0].mxu0 %v35
  %v112 = vpop.f32.mrb[0].mxu0
  %v113 = vadd.f32 0.0, %v112
  %v114 = vpop.f32.mrb[0].mxu0
  %115 = vmatprep.mubr.f32.mxu0 0.0
  %116 = vmatmul.mubr.f32.gmra.mrb[0].mxu0 %v38
  %v117 = vpop.f32.mrb[0].mxu0
  %v118 = vadd.f32 0.0, %v117
  %v119 = vpop.f32.mrb[0].mxu0
  %120 = vmatprep.mubr.f32.mxu0 0.0
  %121 = vmatmul.mubr.f32.gmra.mrb[0].mxu0 %v41
  %v122 = vpop.f32.mrb[0].mxu0
  %v123 = vadd.f32 0.0, %v122
  %v124 = vpop.f32.mrb[0].mxu0
  %125 = vmatprep.mubr.f32.mxu0 0.0
  %126 = vmatmul.mubr.f32.gmra.mrb[0].mxu0 %v44
  %v127 = vpop.f32.mrb[0].mxu0
  %v128 = vadd.f32 0.0, %v127
  %v129 = vpop.f32.mrb[0].mxu0
  %130 = vdwg.mxu0
  %v131 = vadd.f32 %v113, %v118
  %v132 = vadd.f32 %v131, %v123
  %v133 = vadd.f32 %v132, %v128
  %v134 = vrot.slane %v133, 4
  %v135 = vadd.f32 %v133, %v134
  %v136 = vrot.slane %v135, 2
  %v137 = vadd.f32 %v135, %v136
  %v138 = vrot.slane %v137, 1
  %v139 = vadd.f32 %v137, %v138
  %v140 = vmul.f32 %v113, %v113
  %v141 = vmul.f32 %v118, %v118
  %v142 = vmul.f32 %v123, %v123
  %v143 = vmul.f32 %v128, %v128
  %v144 = vadd.f32 %v140, %v141
  %v145 = vadd.f32 %v144, %v142
  %v146 = vadd.f32 %v145, %v143
  %v147 = vrot.slane %v146, 4
  %v148 = vadd.f32 %v146, %v147
  %v149 = vrot.slane %v148, 2
  %v150 = vadd.f32 %v148, %v149
  %v151 = vrot.slane %v150, 1
  %v152 = vadd.f32 %v150, %v151
  %v153 = vlaneseq
  %v154 = vshrl.u32 %v153, 7
  %vm155 = vcmp.eq.s32.totalorder %v154, 0
  %vm156 = vcmp.eq.s32.totalorder %v154, 1
  %v157 = vsel %vm156, %v152, 0.0
  %v158 = vsel %vm155, %v139, %v157
  %v159 = vld [vmem:[%s2] sm:$0xff]
  %v160 = vld [vmem:[%s2 + $0x8] sm:$0xff]
  %v161 = vld [vmem:[%s2 + $0x10] sm:$0xff]
  %v162 = vld [vmem:[%s2 + $0x18] sm:$0xff]
  %v163 = vld [vmem:[%s2 + $0x20] sm:$0xff]
  %v164 = vld [vmem:[%s2 + $0x28] sm:$0xff]
  %v165 = vld [vmem:[%s2 + $0x30] sm:$0xff]
  %v166 = vld [vmem:[%s2 + $0x38] sm:$0xff]
  %v167 = vld [vmem:[%s2 + $0x40] sm:$0xff]
  %v168 = vld [vmem:[%s2 + $0x48] sm:$0xff]
  %v169 = vld [vmem:[%s2 + $0x50] sm:$0xff]
  %v170 = vld [vmem:[%s2 + $0x58] sm:$0xff]
  %v171 = vld [vmem:[%s2 + $0x60] sm:$0xff]
  %v172 = vld [vmem:[%s2 + $0x68] sm:$0xff]
  %v173 = vld [vmem:[%s2 + $0x70] sm:$0xff]
  %v174 = vld [vmem:[%s2 + $0x78] sm:$0xff]
  %175 = vmatprep.subr.mxu0 0.0
  %176 = vmatpush1.msra.mxu0 %v159
  %177 = vmatprep.subr.mxu0 0.0
  %178 = vmatpush1.msra.mxu0 %v160
  %179 = vmatprep.subr.mxu0 0.0
  %180 = vmatpush1.msra.mxu0 %v161
  %181 = vmatprep.subr.mxu0 0.0
  %182 = vmatpush1.msra.mxu0 %v162
  %183 = vmatprep.subr.mxu0 0.0
  %184 = vmatpush1.msra.mxu0 %v163
  %185 = vmatprep.subr.mxu0 0.0
  %186 = vmatpush1.msra.mxu0 %v164
  %187 = vmatprep.subr.mxu0 0.0
  %188 = vmatpush1.msra.mxu0 %v165
  %189 = vmatprep.subr.mxu0 0.0
  %190 = vmatpush1.msra.mxu0 %v166
  %191 = vmatprep.subr.mxu0 0.0
  %192 = vmatpush1.msra.mxu0 %v167
  %193 = vmatprep.subr.mxu0 0.0
  %194 = vmatpush1.msra.mxu0 %v168
  %195 = vmatprep.subr.mxu0 0.0
  %196 = vmatpush1.msra.mxu0 %v169
  %197 = vmatprep.subr.mxu0 0.0
  %198 = vmatpush1.msra.mxu0 %v170
  %199 = vmatprep.subr.mxu0 0.0
  %200 = vmatpush1.msra.mxu0 %v171
  %201 = vmatprep.subr.mxu0 0.0
  %202 = vmatpush1.msra.mxu0 %v172
  %203 = vmatprep.subr.mxu0 0.0
  %204 = vmatpush1.msra.mxu0 %v173
  %205 = vmatprep.subr.mxu0 0.0
  %206 = vmatpush1.msra.mxu0 %v174
  %207 = vmatprep.subr.mxu0 0.0
  %208 = vmatpush1.msra.mxu0 0.0
  %209 = vmatprep.subr.mxu0 0.0
  %210 = vmatpush1.msra.mxu0 0.0
  %211 = vmatprep.subr.mxu0 0.0
  %212 = vmatpush1.msra.mxu0 0.0
  %213 = vmatprep.subr.mxu0 0.0
  %214 = vmatpush1.msra.mxu0 0.0
  %215 = vmatprep.subr.mxu0 0.0
  %216 = vmatpush1.msra.mxu0 0.0
  %217 = vmatprep.subr.mxu0 0.0
  %218 = vmatpush1.msra.mxu0 0.0
  %219 = vmatprep.subr.mxu0 0.0
  %220 = vmatpush1.msra.mxu0 0.0
  %221 = vmatprep.subr.mxu0 0.0
  %222 = vmatpush1.msra.mxu0 0.0
  %223 = vmatprep.subr.mxu0 0.0
  %224 = vmatpush1.msra.mxu0 0.0
  %225 = vmatprep.subr.mxu0 0.0
  %226 = vmatpush1.msra.mxu0 0.0
  %227 = vmatprep.subr.mxu0 0.0
  %228 = vmatpush1.msra.mxu0 0.0
  %229 = vmatprep.subr.mxu0 0.0
  %230 = vmatpush1.msra.mxu0 0.0
  %231 = vmatprep.subr.mxu0 0.0
  %232 = vmatpush1.msra.mxu0 0.0
  %233 = vmatprep.subr.mxu0 0.0
  %234 = vmatpush1.msra.mxu0 0.0
  %235 = vmatprep.subr.mxu0 0.0
  %236 = vmatpush1.msra.mxu0 0.0
  %237 = vmatprep.subr.mxu0 0.0
  %238 = vmatpush1.msra.mxu0 0.0
  %239 = vmatprep.mubr.f32.mxu0 0.0
  %240 = vmatmul.mubr.f32.gmra.mrb[0].mxu0 %v158
  %v241 = vpop.f32.mrb[0].mxu0
  %v242 = vadd.f32 0.0, %v241
  %v243 = vpop.f32.mrb[0].mxu0
  %244 = vdwg.mxu0
  %v245 = vmul.f32 %v242, %v242
  %v247 = vrot.slane %v245, 7
  %v249 = vsub.f32 %v242, %v247
  %v250 = vld [vmem:[%s3] sm:$0x1]
  %v251 = vadd.f32 %v249, 1e-05
  %v252 = vrsqrt.pop %v251
  %v255 = vunpack.c.l.s4 1966171168
  %v256 = vunpack.c.0.s8 %v255
  %v257 = vlaneseq
  %v258 = vshrl.u32 %v257, 7
  %v259 = vsub.s32 %v256, %v258
  %v260 = vrot.slane %v252, %v259
  %v261 = vcombine.high %v260, %v260
  %v263 = vunpack.c.l.s4 1966171168
  %v264 = vunpack.c.0.s8 %v263
  %v265 = vlaneseq
  %v266 = vshrl.u32 %v265, 7
  %v267 = vsub.s32 %v264, %v266
  %v268 = vrot.slane %v261, %v267
  %v270 = vmul.f32 %v250, %v268
  %v271 = vld [vmem:[%s4] sm:$0x1]
  %v272 = vmul.f32 %v242, %v270
  %v273 = vsub.f32 %v271, %v272
  %v275 = vlaneseq
  %v276 = vshrl.u32 %v275, 7
  %v277 = vsub.s32 0, %v276
  %v278 = vrot.slane %v270, %v277
  %v280 = vmul.f32 %v113, %v278
  %v281 = vmul.f32 %v118, %v278
  %v282 = vmul.f32 %v123, %v278
  %v283 = vmul.f32 %v128, %v278
  %v285 = vlaneseq
  %v286 = vshrl.u32 %v285, 7
  %v287 = vsub.s32 0, %v286
  %v288 = vrot.slane %v273, %v287
  %v290 = vadd.f32 %v280, %v288
  %v291 = vadd.f32 %v281, %v288
  %v292 = vadd.f32 %v282, %v288
  %v293 = vadd.f32 %v283, %v288
  %294 = vst [vmem:[%s5] sm:$0xff] %v290
  %295 = vst [vmem:[%s5 + $0x8] sm:$0xff] %v291
  %296 = vst [vmem:[%s5 + $0x10] sm:$0xff] %v292
  %297 = vst [vmem:[%s5 + $0x18] sm:$0xff] %v293
  // Predicated region
  $region22: #{deblur_forward.6} parent=0 // pred_check
    _
  $region23: #{deblur_forward.6} parent=0 // pred_check_branch
    %299 = sbr.rel (0) target = $region25
  $region24: #{deblur_forward.6} parent=0 // pred_region
    _
  $region25: #{deblur_forward.6} parent=0 // pred_fallthru
    _
  // Predicated region
  $region26: #{deblur_forward.6} parent=0 // pred_check
    _
  $region27: #{deblur_forward.6} parent=0 // pred_check_branch
    %301 = sbr.rel (0) target = $region29
  $region28: #{deblur_forward.6} parent=0 // pred_region
    _
  $region29: #{deblur_forward.6} parent=0 // pred_fallthru
    _

// kernel: deblur_forward.5
$region0: #{deblur_forward.5}
  #allocation0 [shape = 'u32[]', space=smem, size = 0x4, offset = 0x4, fixed_abs, tag = 'smem constant byte address 0x4 - core index']
  #allocation1 [shape = 'u32[144,128]{1,0:T(1,128)}', space=vmem, size = 0x12000, scoped, tag = 'internal scratch']
  %s0 = inlined_call_operand.vmem [shape: f32[128,27], index: 0, kind: input, shape index: {}]
  %s1 = inlined_call_operand.vmem [shape: f32[27,128], index: 1, kind: input, shape index: {}]
  %s2 = inlined_call_operand.hbm [shape: f32[128,128], index: 2, kind: input, shape index: {}]
  %s3 = inlined_call_operand.vmem [shape: f32[1,128], index: 3, kind: input, shape index: {}]
  %s4 = inlined_call_operand.vmem [shape: f32[1,128], index: 4, kind: input, shape index: {}]
  %s5 = inlined_call_operand.vmem [shape: f32[128,128], index: 5, kind: output, shape index: {}]
  %s6 = sld [smem:[#allocation0]]
  $region34: #{deblur_forward.5} parent=0
    _
  %s8 = ssub.s32 1, %s6
  %s9 = scalar_select 0, %s8, %s6
  $region1: #{deblur_forward.5} parent=0
    #allocation2 [shape = 'u8[65536]{0}', space=vmem, size = 0x10000, scoped, tag = 'input window, operand 2, single buffered']
    #allocation3 [shape = 's32[1]{0}', space=sflag, size = 0x4, scoped, tag = 'scoped memory for deblur_forward.5']
    %10 = vsyncpa [#allocation3], 0
    // Predicated region
    $region2: #{deblur_forward.5} parent=1 // pred_check
      _
    $region3: #{deblur_forward.5} parent=1 // pred_check_branch
      %12 = sbr.rel (0) target = $region5
    $region4: #{deblur_forward.5} parent=1 // pred_region
      _
    $region5: #{deblur_forward.5} parent=1 // pred_fallthru
      _
    // Predicated region
    $region6: #{deblur_forward.5} parent=1 // pred_check
      _
    $region7: #{deblur_forward.5} parent=1 // pred_check_branch
      %14 = sbr.rel (0) target = $region9
    $region8: #{deblur_forward.5} parent=1 // pred_region
      _
    $region9: #{deblur_forward.5} parent=1 // pred_fallthru
      _
    // Predicated region
    $region10: #{deblur_forward.5} parent=1 // pred_check
      _
    $region11: #{deblur_forward.5} parent=1 // pred_check_branch
      %16 = sbr.rel (0) target = $region13
    $region12: #{deblur_forward.5} parent=1 // pred_region
      %s18 = ssub.s32 2048, 2048
      %19 = vsyncadd [#allocation3], %s18
      %s20 = sshll.u32 [#allocation2], 4
      %s21 = int_to_ptr.vmem [resolvable:$true] %s20
      %26 = dma.hbm_to_vmem [thread:$0]  %s2, 2048, %s21, [#allocation3], 128, 128, 8
    $region13: #{deblur_forward.5} parent=1 // pred_fallthru
      _
    // Predicated region
    $region14: #{deblur_forward.5} parent=1 // pred_check
      _
    $region15: #{deblur_forward.5} parent=1 // pred_check_branch
      %28 = sbr.rel (0) target = $region17
    $region16: #{deblur_forward.5} parent=1 // pred_region
      _
    $region17: #{deblur_forward.5} parent=1 // pred_fallthru
      _
    // Predicated region
    $region18: #{deblur_forward.5} parent=1 // pred_check
      _
    $region19: #{deblur_forward.5} parent=1 // pred_check_branch
      %30 = sbr.rel (0) target = $region21
    $region20: #{deblur_forward.5} parent=1 // pred_region
      _
    $region21: #{deblur_forward.5} parent=1 // pred_fallthru
      _
    // Predicated region
    $region22: #{deblur_forward.5} parent=1 // pred_check
      _
    $region23: #{deblur_forward.5} parent=1 // pred_check_branch
      %32 = sbr.rel (0) target = $region25
    $region24: #{deblur_forward.5} parent=1 // pred_region
      %33 = dma.done [#allocation3], 2048
    $region25: #{deblur_forward.5} parent=1 // pred_fallthru
      _
    %v34 = vld [vmem:[%s0] sm:$0xff]
    %v35 = vld [vmem:[%s0 + $0x8] sm:$0xff]
    %v36 = vld [vmem:[%s0 + $0x10] sm:$0xff]
    %v37 = vld [vmem:[%s0 + $0x18] sm:$0xff]
    %v38 = vld [vmem:[%s0 + $0x20] sm:$0xff]
    %v39 = vld [vmem:[%s0 + $0x28] sm:$0xff]
    %v40 = vld [vmem:[%s0 + $0x30] sm:$0xff]
    %v41 = vld [vmem:[%s0 + $0x38] sm:$0xff]
    %v42 = vld [vmem:[%s0 + $0x40] sm:$0xff]
    %v43 = vld [vmem:[%s0 + $0x48] sm:$0xff]
    %v44 = vld [vmem:[%s0 + $0x50] sm:$0xff]
    %v45 = vld [vmem:[%s0 + $0x58] sm:$0xff]
    %v46 = vld [vmem:[%s0 + $0x60] sm:$0xff]
    %v47 = vld [vmem:[%s0 + $0x68] sm:$0xff]
    %v48 = vld [vmem:[%s0 + $0x70] sm:$0xff]
    %v49 = vld [vmem:[%s0 + $0x78] sm:$0xff]
    %v50 = vld [vmem:[%s1] sm:$0xff]
    %v51 = vld [vmem:[%s1 + $0x8] sm:$0xff]
    %v52 = vld [vmem:[%s1 + $0x10] sm:$0xff]
    %v53 = vld [vmem:[%s1 + $0x18] sm:$0x7]
    %vm54 = vcmask 220160
    %v56 = vsel %vm54, %v34, 0
    %v59 = vsel %vm54, %v35, 0
    %v62 = vsel %vm54, %v36, 0
    %v65 = vsel %vm54, %v37, 0
    %v68 = vsel %vm54, %v38, 0
    %v71 = vsel %vm54, %v39, 0
    %v74 = vsel %vm54, %v40, 0
    %v77 = vsel %vm54, %v41, 0
    %v80 = vsel %vm54, %v42, 0
    %v83 = vsel %vm54, %v43, 0
    %v86 = vsel %vm54, %v44, 0
    %v89 = vsel %vm54, %v45, 0
    %v92 = vsel %vm54, %v46, 0
    %v95 = vsel %vm54, %v47, 0
    %v98 = vsel %vm54, %v48, 0
    %v101 = vsel %vm54, %v49, 0
    %vm103 = vcmask 1042432
    %v105 = vsel %vm103, %v53, 0
    %107 = vmatprep.subr.mxu0 0.0
    %108 = vmatpush1.msra.mxu0 %v50
    %109 = vmatprep.subr.mxu0 0.0
    %110 = vmatpush1.msra.mxu0 %v51
    %111 = vmatprep.subr.mxu0 0.0
    %112 = vmatpush1.msra.mxu0 %v52
    %113 = vmatprep.subr.mxu0 0.0
    %114 = vmatpush1.msra.mxu0 %v105
    %115 = vmatprep.subr.mxu0 0.0
    %116 = vmatpush1.msra.mxu0 0.0
    %117 = vmatprep.subr.mxu0 0.0
    %118 = vmatpush1.msra.mxu0 0.0
    %119 = vmatprep.subr.mxu0 0.0
    %120 = vmatpush1.msra.mxu0 0.0
    %121 = vmatprep.subr.mxu0 0.0
    %122 = vmatpush1.msra.mxu0 0.0
    %123 = vmatprep.subr.mxu0 0.0
    %124 = vmatpush1.msra.mxu0 0.0
    %125 = vmatprep.subr.mxu0 0.0
    %126 = vmatpush1.msra.mxu0 0.0
    %127 = vmatprep.subr.mxu0 0.0
    %128 = vmatpush1.msra.mxu0 0.0
    %129 = vmatprep.subr.mxu0 0.0
    %130 = vmatpush1.msra.mxu0 0.0
    %131 = vmatprep.subr.mxu0 0.0
    %132 = vmatpush1.msra.mxu0 0.0
    %133 = vmatprep.subr.mxu0 0.0
    %134 = vmatpush1.msra.mxu0 0.0
    %135 = vmatprep.subr.mxu0 0.0
    %136 = vmatpush1.msra.mxu0 0.0
    %137 = vmatprep.subr.mxu0 0.0
    %138 = vmatpush1.msra.mxu0 0.0
    %139 = vmatprep.subr.mxu0 0.0
    %140 = vmatpush1.msra.mxu0 0.0
    %141 = vmatprep.subr.mxu0 0.0
    %142 = vmatpush1.msra.mxu0 0.0
    %143 = vmatprep.subr.mxu0 0.0
    %144 = vmatpush1.msra.mxu0 0.0
    %145 = vmatprep.subr.mxu0 0.0
    %146 = vmatpush1.msra.mxu0 0.0
    %147 = vmatprep.subr.mxu0 0.0
    %148 = vmatpush1.msra.mxu0 0.0
    %149 = vmatprep.subr.mxu0 0.0
    %150 = vmatpush1.msra.mxu0 0.0
    %151 = vmatprep.subr.mxu0 0.0
    %152 = vmatpush1.msra.mxu0 0.0
    %153 = vmatprep.subr.mxu0 0.0
    %154 = vmatpush1.msra.mxu0 0.0
    %155 = vmatprep.subr.mxu0 0.0
    %156 = vmatpush1.msra.mxu0 0.0
    %157 = vmatprep.subr.mxu0 0.0
    %158 = vmatpush1.msra.mxu0 0.0
    %159 = vmatprep.subr.mxu0 0.0
    %160 = vmatpush1.msra.mxu0 0.0
    %161 = vmatprep.subr.mxu0 0.0
    %162 = vmatpush1.msra.mxu0 0.0
    %163 = vmatprep.subr.mxu0 0.0
    %164 = vmatpush1.msra.mxu0 0.0
    %165 = vmatprep.subr.mxu0 0.0
    %166 = vmatpush1.msra.mxu0 0.0
    %167 = vmatprep.subr.mxu0 0.0
    %168 = vmatpush1.msra.mxu0 0.0
    %169 = vmatprep.subr.mxu0 0.0
    %170 = vmatpush1.msra.mxu0 0.0
    %171 = vmatprep.mubr.f32.mxu0 0.0
    %172 = vmatmul.mubr.f32.gmra.mrb[0].mxu0 %v56
    %v173 = vpop.f32.mrb[0].mxu0
    %v174 = vadd.f32 0.0, %v173
    %v175 = vpop.f32.mrb[0].mxu0
    %176 = vmatprep.mubr.f32.mxu0 0.0
    %177 = vmatmul.mubr.f32.gmra.mrb[0].mxu0 %v59
    %v178 = vpop.f32.mrb[0].mxu0
    %v179 = vadd.f32 0.0, %v178
    %v180 = vpop.f32.mrb[0].mxu0
    %181 = vmatprep.mubr.f32.mxu0 0.0
    %182 = vmatmul.mubr.f32.gmra.mrb[0].mxu0 %v62
    %v183 = vpop.f32.mrb[0].mxu0
    %v184 = vadd.f32 0.0, %v183
    %v185 = vpop.f32.mrb[0].mxu0
    %186 = vmatprep.mubr.f32.mxu0 0.0
    %187 = vmatmul.mubr.f32.gmra.mrb[0].mxu0 %v65
    %v188 = vpop.f32.mrb[0].mxu0
    %v189 = vadd.f32 0.0, %v188
    %v190 = vpop.f32.mrb[0].mxu0
    %191 = vmatprep.mubr.f32.mxu0 0.0
    %192 = vmatmul.mubr.f32.gmra.mrb[0].mxu0 %v68
    %v193 = vpop.f32.mrb[0].mxu0
    %v194 = vadd.f32 0.0, %v193
    %v195 = vpop.f32.mrb[0].mxu0
    %196 = vmatprep.mubr.f32.mxu0 0.0
    %197 = vmatmul.mubr.f32.gmra.mrb[0].mxu0 %v71
    %v198 = vpop.f32.mrb[0].mxu0
    %v199 = vadd.f32 0.0, %v198
    %v200 = vpop.f32.mrb[0].mxu0
    %201 = vmatprep.mubr.f32.mxu0 0.0
    %202 = vmatmul.mubr.f32.gmra.mrb[0].mxu0 %v74
    %v203 = vpop.f32.mrb[0].mxu0
    %v204 = vadd.f32 0.0, %v203
    %v205 = vpop.f32.mrb[0].mxu0
    %206 = vmatprep.mubr.f32.mxu0 0.0
    %207 = vmatmul.mubr.f32.gmra.mrb[0].mxu0 %v77
    %v208 = vpop.f32.mrb[0].mxu0
    %v209 = vadd.f32 0.0, %v208
    %v210 = vpop.f32.mrb[0].mxu0
    %211 = vmatprep.mubr.f32.mxu0 0.0
    %212 = vmatmul.mubr.f32.gmra.mrb[0].mxu0 %v80
    %v213 = vpop.f32.mrb[0].mxu0
    %v214 = vadd.f32 0.0, %v213
    %v215 = vpop.f32.mrb[0].mxu0
    %216 = vmatprep.mubr.f32.mxu0 0.0
    %217 = vmatmul.mubr.f32.gmra.mrb[0].mxu0 %v83
    %v218 = vpop.f32.mrb[0].mxu0
    %v219 = vadd.f32 0.0, %v218
    %v220 = vpop.f32.mrb[0].mxu0
    %221 = vmatprep.mubr.f32.mxu0 0.0
    %222 = vmatmul.mubr.f32.gmra.mrb[0].mxu0 %v86
    %v223 = vpop.f32.mrb[0].mxu0
    %v224 = vadd.f32 0.0, %v223
    %v225 = vpop.f32.mrb[0].mxu0
    %226 = vmatprep.mubr.f32.mxu0 0.0
    %227 = vmatmul.mubr.f32.gmra.mrb[0].mxu0 %v89
    %v228 = vpop.f32.mrb[0].mxu0
    %v229 = vadd.f32 0.0, %v228
    %v230 = vpop.f32.mrb[0].mxu0
    %231 = vmatprep.mubr.f32.mxu0 0.0
    %232 = vmatmul.mubr.f32.gmra.mrb[0].mxu0 %v92
    %v233 = vpop.f32.mrb[0].mxu0
    %v234 = vadd.f32 0.0, %v233
    %v235 = vpop.f32.mrb[0].mxu0
    %236 = vmatprep.mubr.f32.mxu0 0.0
    %237 = vmatmul.mubr.f32.gmra.mrb[0].mxu0 %v95
    %v238 = vpop.f32.mrb[0].mxu0
    %v239 = vadd.f32 0.0, %v238
    %v240 = vpop.f32.mrb[0].mxu0
    %241 = vmatprep.mubr.f32.mxu0 0.0
    %242 = vmatmul.mubr.f32.gmra.mrb[0].mxu0 %v98
    %v243 = vpop.f32.mrb[0].mxu0
    %v244 = vadd.f32 0.0, %v243
    %v245 = vpop.f32.mrb[0].mxu0
    %246 = vmatprep.mubr.f32.mxu0 0.0
    %247 = vmatmul.mubr.f32.gmra.mrb[0].mxu0 %v101
    %v248 = vpop.f32.mrb[0].mxu0
    %v249 = vadd.f32 0.0, %v248
    %v250 = vpop.f32.mrb[0].mxu0
    %251 = vdwg.mxu0
    %v252 = vadd.f32 %v174, %v179
    %v253 = vadd.f32 %v252, %v184
    %v254 = vadd.f32 %v253, %v189
    %v255 = vadd.f32 %v254, %v194
    %v256 = vadd.f32 %v255, %v199
    %v257 = vadd.f32 %v256, %v204
    %v258 = vadd.f32 %v257, %v209
    %v259 = vadd.f32 %v258, %v214
    %v260 = vadd.f32 %v259, %v219
    %v261 = vadd.f32 %v260, %v224
    %v262 = vadd.f32 %v261, %v229
    %v263 = vadd.f32 %v262, %v234
    %v264 = vadd.f32 %v263, %v239
    %v265 = vadd.f32 %v264, %v244
    %v266 = vadd.f32 %v265, %v249
    %v267 = vrot.slane %v266, 4
    %v268 = vadd.f32 %v266, %v267
    %v269 = vrot.slane %v268, 2
    %v270 = vadd.f32 %v268, %v269
    %v271 = vrot.slane %v270, 1
    %v272 = vadd.f32 %v270, %v271
    %v273 = vmul.f32 %v174, %v174
    %v274 = vmul.f32 %v179, %v179
    %v275 = vmul.f32 %v184, %v184
    %v276 = vmul.f32 %v189, %v189
    %v277 = vmul.f32 %v194, %v194
    %v278 = vmul.f32 %v199, %v199
    %v279 = vmul.f32 %v204, %v204
    %v280 = vmul.f32 %v209, %v209
    %v281 = vmul.f32 %v214, %v214
    %v282 = vmul.f32 %v219, %v219
    %v283 = vmul.f32 %v224, %v224
    %v284 = vmul.f32 %v229, %v229
    %v285 = vmul.f32 %v234, %v234
    %v286 = vmul.f32 %v239, %v239
    %v287 = vmul.f32 %v244, %v244
    %v288 = vmul.f32 %v249, %v249
    %v289 = vadd.f32 %v273, %v274
    %v290 = vadd.f32 %v289, %v275
    %v291 = vadd.f32 %v290, %v276
    %v292 = vadd.f32 %v291, %v277
    %v293 = vadd.f32 %v292, %v278
    %v294 = vadd.f32 %v293, %v279
    %v295 = vadd.f32 %v294, %v280
    %v296 = vadd.f32 %v295, %v281
    %v297 = vadd.f32 %v296, %v282
    %v298 = vadd.f32 %v297, %v283
    %v299 = vadd.f32 %v298, %v284
    %v300 = vadd.f32 %v299, %v285
    %v301 = vadd.f32 %v300, %v286
    %v302 = vadd.f32 %v301, %v287
    %v303 = vadd.f32 %v302, %v288
    %v304 = vrot.slane %v303, 4
    %v305 = vadd.f32 %v303, %v304
    %v306 = vrot.slane %v305, 2
    %v307 = vadd.f32 %v305, %v306
    %v308 = vrot.slane %v307, 1
    %v309 = vadd.f32 %v307, %v308
    %v310 = vlaneseq
    %v311 = vshrl.u32 %v310, 7
    %vm312 = vcmp.eq.s32.totalorder %v311, 0
    %vm313 = vcmp.eq.s32.totalorder %v311, 1
    %v314 = vsel %vm313, %v309, 0.0
    %v315 = vsel %vm312, %v272, %v314
    %v316 = vld [vmem:[#allocation2] sm:$0xff]
    %v317 = vld [vmem:[#allocation2 + $0x8] sm:$0xff]
    %v318 = vld [vmem:[#allocation2 + $0x10] sm:$0xff]
    %v319 = vld [vmem:[#allocation2 + $0x18] sm:$0xff]
    %v320 = vld [vmem:[#allocation2 + $0x20] sm:$0xff]
    %v321 = vld [vmem:[#allocation2 + $0x28] sm:$0xff]
    %v322 = vld [vmem:[#allocation2 + $0x30] sm:$0xff]
    %v323 = vld [vmem:[#allocation2 + $0x38] sm:$0xff]
    %v324 = vld [vmem:[#allocation2 + $0x40] sm:$0xff]
    %v325 = vld [vmem:[#allocation2 + $0x48] sm:$0xff]
    %v326 = vld [vmem:[#allocation2 + $0x50] sm:$0xff]
    %v327 = vld [vmem:[#allocation2 + $0x58] sm:$0xff]
    %v328 = vld [vmem:[#allocation2 + $0x60] sm:$0xff]
    %v329 = vld [vmem:[#allocation2 + $0x68] sm:$0xff]
    %v330 = vld [vmem:[#allocation2 + $0x70] sm:$0xff]
    %v331 = vld [vmem:[#allocation2 + $0x78] sm:$0xff]
    %332 = vmatprep.subr.mxu0 0.0
    %333 = vmatpush1.msra.mxu0 %v316
    %334 = vmatprep.subr.mxu0 0.0
    %335 = vmatpush1.msra.mxu0 %v317
    %336 = vmatprep.subr.mxu0 0.0
    %337 = vmatpush1.msra.mxu0 %v318
    %338 = vmatprep.subr.mxu0 0.0
    %339 = vmatpush1.msra.mxu0 %v319
    %340 = vmatprep.subr.mxu0 0.0
    %341 = vmatpush1.msra.mxu0 %v320
    %342 = vmatprep.subr.mxu0 0.0
    %343 = vmatpush1.msra.mxu0 %v321
    %344 = vmatprep.subr.mxu0 0.0
    %345 = vmatpush1.msra.mxu0 %v322
    %346 = vmatprep.subr.mxu0 0.0
    %347 = vmatpush1.msra.mxu0 %v323
    %348 = vmatprep.subr.mxu0 0.0
    %349 = vmatpush1.msra.mxu0 %v324
    %350 = vmatprep.subr.mxu0 0.0
    %351 = vmatpush1.msra.mxu0 %v325
    %352 = vmatprep.subr.mxu0 0.0
    %353 = vmatpush1.msra.mxu0 %v326
    %354 = vmatprep.subr.mxu0 0.0
    %355 = vmatpush1.msra.mxu0 %v327
    %356 = vmatprep.subr.mxu0 0.0
    %357 = vmatpush1.msra.mxu0 %v328
    %358 = vmatprep.subr.mxu0 0.0
    %359 = vmatpush1.msra.mxu0 %v329
    %360 = vmatprep.subr.mxu0 0.0
    %361 = vmatpush1.msra.mxu0 %v330
    %362 = vmatprep.subr.mxu0 0.0
    %363 = vmatpush1.msra.mxu0 %v331
    %364 = vmatprep.subr.mxu0 0.0
    %365 = vmatpush1.msra.mxu0 0.0
    %366 = vmatprep.subr.mxu0 0.0
    %367 = vmatpush1.msra.mxu0 0.0
    %368 = vmatprep.subr.mxu0 0.0
    %369 = vmatpush1.msra.mxu0 0.0
    %370 = vmatprep.subr.mxu0 0.0
    %371 = vmatpush1.msra.mxu0 0.0
    %372 = vmatprep.subr.mxu0 0.0
    %373 = vmatpush1.msra.mxu0 0.0
    %374 = vmatprep.subr.mxu0 0.0
    %375 = vmatpush1.msra.mxu0 0.0
    %376 = vmatprep.subr.mxu0 0.0
    %377 = vmatpush1.msra.mxu0 0.0
    %378 = vmatprep.subr.mxu0 0.0
    %379 = vmatpush1.msra.mxu0 0.0
    %380 = vmatprep.subr.mxu0 0.0
    %381 = vmatpush1.msra.mxu0 0.0
    %382 = vmatprep.subr.mxu0 0.0
    %383 = vmatpush1.msra.mxu0 0.0
    %384 = vmatprep.subr.mxu0 0.0
    %385 = vmatpush1.msra.mxu0 0.0
    %386 = vmatprep.subr.mxu0 0.0
    %387 = vmatpush1.msra.mxu0 0.0
    %388 = vmatprep.subr.mxu0 0.0
    %389 = vmatpush1.msra.mxu0 0.0
    %390 = vmatprep.subr.mxu0 0.0
    %391 = vmatpush1.msra.mxu0 0.0
    %392 = vmatprep.subr.mxu0 0.0
    %393 = vmatpush1.msra.mxu0 0.0
    %394 = vmatprep.subr.mxu0 0.0
    %395 = vmatpush1.msra.mxu0 0.0
    %396 = vmatprep.mubr.f32.mxu0 0.0
    %397 = vmatmul.mubr.f32.gmra.mrb[0].mxu0 %v315
    %v398 = vpop.f32.mrb[0].mxu0
    %v399 = vadd.f32 0.0, %v398
    %v400 = vpop.f32.mrb[0].mxu0
    %401 = vdwg.mxu0
    %v402 = vmul.f32 %v399, %v399
    %v404 = vrot.slane %v402, 7
    %v406 = vsub.f32 %v399, %v404
    %v407 = vld [vmem:[%s3] sm:$0x1]
    %v408 = vadd.f32 %v406, 1e-05
    %v409 = vrsqrt.pop %v408
    %v412 = vunpack.c.l.s4 1966171168
    %v413 = vunpack.c.0.s8 %v412
    %v414 = vlaneseq
    %v415 = vshrl.u32 %v414, 7
    %v416 = vsub.s32 %v413, %v415
    %v417 = vrot.slane %v409, %v416
    %v418 = vcombine.high %v417, %v417
    %v420 = vunpack.c.l.s4 1966171168
    %v421 = vunpack.c.0.s8 %v420
    %v422 = vlaneseq
    %v423 = vshrl.u32 %v422, 7
    %v424 = vsub.s32 %v421, %v423
    %v425 = vrot.slane %v418, %v424
    %v427 = vmul.f32 %v407, %v425
    %v428 = vld [vmem:[%s4] sm:$0x1]
    %v429 = vmul.f32 %v399, %v427
    %v430 = vsub.f32 %v428, %v429
    %v432 = vlaneseq
    %v433 = vshrl.u32 %v432, 7
    %v434 = vsub.s32 0, %v433
    %v435 = vrot.slane %v427, %v434
    %v437 = vmul.f32 %v174, %v435
    %v438 = vmul.f32 %v179, %v435
    %v439 = vmul.f32 %v184, %v435
    %v440 = vmul.f32 %v189, %v435
    %v441 = vmul.f32 %v194, %v435
    %v442 = vmul.f32 %v199, %v435
    %v443 = vmul.f32 %v204, %v435
    %v444 = vmul.f32 %v209, %v435
    %v445 = vmul.f32 %v214, %v435
    %v446 = vmul.f32 %v219, %v435
    %v447 = vmul.f32 %v224, %v435
    %v448 = vmul.f32 %v229, %v435
    %v449 = vmul.f32 %v234, %v435
    %v450 = vmul.f32 %v239, %v435
    %v451 = vmul.f32 %v244, %v435
    %v452 = vmul.f32 %v249, %v435
    %v454 = vlaneseq
    %v455 = vshrl.u32 %v454, 7
    %v456 = vsub.s32 0, %v455
    %v457 = vrot.slane %v430, %v456
    %v459 = vadd.f32 %v437, %v457
    %v460 = vadd.f32 %v438, %v457
    %v461 = vadd.f32 %v439, %v457
    %v462 = vadd.f32 %v440, %v457
    %v463 = vadd.f32 %v441, %v457
    %v464 = vadd.f32 %v442, %v457
    %v465 = vadd.f32 %v443, %v457
    %v466 = vadd.f32 %v444, %v457
    %v467 = vadd.f32 %v445, %v457
    %v468 = vadd.f32 %v446, %v457
    %v469 = vadd.f32 %v447, %v457
    %v470 = vadd.f32 %v448, %v457
    %v471 = vadd.f32 %v449, %v457
    %v472 = vadd.f32 %v450, %v457
    %v473 = vadd.f32 %v451, %v457
    %v474 = vadd.f32 %v452, %v457
    %475 = vst [vmem:[%s5] sm:$0xff] %v459
    %476 = vst [vmem:[%s5 + $0x8] sm:$0xff] %v460
    %477 = vst [vmem:[%s5 + $0x10] sm:$0xff] %v461
    %478 = vst [vmem:[%s5 + $0x18] sm:$0xff] %v462
    %479 = vst [vmem:[%s5 + $0x20] sm:$0xff] %v463
    %480 = vst [vmem:[%s5 + $0x28] sm:$0xff] %v464
    %481 = vst [vmem:[%s5 + $0x30] sm:$0xff] %v465
    %482 = vst [vmem:[%s5 + $0x38] sm:$0xff] %v466
    %483 = vst [vmem:[%s5 + $0x40] sm:$0xff] %v467
    %484 = vst [vmem:[%s5 + $0x48] sm:$0xff] %v468
    %485 = vst [vmem:[%s5 + $0x50] sm:$0xff] %v469
    %486 = vst [vmem:[%s5 + $0x58] sm:$0xff] %v470
    %487 = vst [vmem:[%s5 + $0x60] sm:$0xff] %v471
    %488 = vst [vmem:[%s5 + $0x68] sm:$0xff] %v472
    %489 = vst [vmem:[%s5 + $0x70] sm:$0xff] %v473
    %490 = vst [vmem:[%s5 + $0x78] sm:$0xff] %v474
    // Predicated region
    $region26: #{deblur_forward.5} parent=1 // pred_check
      _
    $region27: #{deblur_forward.5} parent=1 // pred_check_branch
      %492 = sbr.rel (0) target = $region29
    $region28: #{deblur_forward.5} parent=1 // pred_region
      _
    $region29: #{deblur_forward.5} parent=1 // pred_fallthru
      _
    // Predicated region
    $region30: #{deblur_forward.5} parent=1 // pred_check
      _
    $region31: #{deblur_forward.5} parent=1 // pred_check_branch
      %494 = sbr.rel (0) target = $region33
    $region32: #{deblur_forward.5} parent=1 // pred_region
      _
    $region33: #{deblur_forward.5} parent=1 // pred_fallthru
      _
    %495 = vsyncpa [#allocation3], 1

// kernel: tile.23
$region0: #{tile.23}
  #allocation0 [shape = 's32[1]{0}', space=sflag, size = 0x4, scoped, tag = 'scoped memory for tile.23']
  %s0 = inlined_call_operand.vmem [shape: f32[8], index: 0, kind: input, shape index: {}]
  %s1 = inlined_call_operand.vmem [shape: f32[4,8], index: 1, kind: output, shape index: {}]
  // Predicated region
  $region2: #{tile.23} parent=0 // pred_check
    _
  $region3: #{tile.23} parent=0 // pred_check_branch
    %3 = sbr.rel (0) target = $region5
  $region4: #{tile.23} parent=0 // pred_region
    _
  $region5: #{tile.23} parent=0 // pred_fallthru
    _
  %v4 = vld [vmem:[%s0] ss:$0 sm:$0xff]
  %5 = vst [vmem:[%s1] sm:$0xf] %v4

// kernel: tile.24
$region0: #{tile.24}
  %s0 = inlined_call_operand.vmem [shape: f32[4,8], index: 0, kind: input, shape index: {}]
  %s1 = inlined_call_operand.vmem [shape: f32[32], index: 1, kind: output, shape index: {}]
  $region1: #{tile.24} parent=0
    #allocation0 [shape = 'u8[4096]{0}', space=vmem, size = 0x1000, scoped, tag = 'scoped mem for output reshape']
    #allocation1 [shape = 'u8[4096]{0}', space=vmem, size = 0x1000, scoped, tag = 'scoped mem for input reshape']
    %s3 = sshllo.u32 0, 4
    %v4 = vld [vmem:[%s0] sm:%s3]
    %5 = vst [vmem:[#allocation1] sm:%s3] %v4
    %v6 = vld [vmem:[#allocation1] sm:$0x1]
    %vm7 = vcmask 64512
    %8 = vst.msk [vmem:[#allocation0] sm:$0x1] %vm7, %v6
    %s9 = scalar_lea.vmem [#allocation1], 3
    %v10 = vld [vmem:[%s9] sm:$0x1]
    %11 = vrot.lane.b32.xlu0 %v10, 24
    %v12 = vpop.permute.xlu0 %11
    %vm13 = vcmask 261312
    %14 = vst.msk [vmem:[#allocation0] sm:$0x1] %vm13, %v12
    %s15 = scalar_lea.vmem [#allocation1], 2
    %v16 = vld [vmem:[%s15] sm:$0x1]
    %17 = vrot.lane.b32.xlu0 %v16, 16
    %v18 = vpop.permute.xlu0 %17
    %vm19 = vcmask 195712
    %20 = vst.msk [vmem:[#allocation0] sm:$0x1] %vm19, %v18
    %s21 = scalar_lea.vmem [#allocation1], 1
    %v22 = vld [vmem:[%s21] sm:$0x1]
    %23 = vrot.lane.b32.xlu0 %v22, 8
    %v24 = vpop.permute.xlu0 %23
    %vm25 = vcmask 130112
    %26 = vst.msk [vmem:[#allocation0] sm:$0x1] %vm25, %v24
    %s28 = sshllo.u32 0, 1
    %v30 = vld [vmem:[#allocation0] sm:%s28]
    %s31 = sshllo.u32 0, 1
    %32 = vst [vmem:[%s1] sm:%s31] %v30

// kernel: tile.33
$region0: #{tile.33}
  #allocation0 [shape = 's32[1]{0}', space=sflag, size = 0x4, scoped, tag = 'scoped memory for tile.33']
  %s0 = inlined_call_operand.vmem [shape: f32[4], index: 0, kind: input, shape index: {}]
  %s1 = inlined_call_operand.vmem [shape: f32[4,4], index: 1, kind: output, shape index: {}]
  // Predicated region
  $region2: #{tile.33} parent=0 // pred_check
    _
  $region3: #{tile.33} parent=0 // pred_check_branch
    %3 = sbr.rel (0) target = $region5
  $region4: #{tile.33} parent=0 // pred_region
    _
  $region5: #{tile.33} parent=0 // pred_fallthru
    _
  %v4 = vld [vmem:[%s0] ss:$0 sm:$0xff]
  %5 = vst [vmem:[%s1] sm:$0xf] %v4

// kernel: tile.34
$region0: #{tile.34}
  %s0 = inlined_call_operand.vmem [shape: f32[4,4], index: 0, kind: input, shape index: {}]
  %s1 = inlined_call_operand.vmem [shape: f32[16], index: 1, kind: output, shape index: {}]
  $region1: #{tile.34} parent=0
    #allocation0 [shape = 'u8[4096]{0}', space=vmem, size = 0x1000, scoped, tag = 'scoped mem for output reshape']
    #allocation1 [shape = 'u8[4096]{0}', space=vmem, size = 0x1000, scoped, tag = 'scoped mem for input reshape']
    %s3 = sshllo.u32 0, 4
    %v4 = vld [vmem:[%s0] sm:%s3]
    %5 = vst [vmem:[#allocation1] sm:%s3] %v4
    %v6 = vld [vmem:[#allocation1] sm:$0x1]
    %vm7 = vcmask 31744
    %8 = vst.msk [vmem:[#allocation0] sm:$0x1] %vm7, %v6
    %s9 = scalar_lea.vmem [#allocation1], 3
    %v10 = vld [vmem:[%s9] sm:$0x1]
    %11 = vrot.lane.b32.xlu0 %v10, 12
    %v12 = vpop.permute.xlu0 %11
    %vm13 = vcmask 130144
    %14 = vst.msk [vmem:[#allocation0] sm:$0x1] %vm13, %v12
    %s15 = scalar_lea.vmem [#allocation1], 2
    %v16 = vld [vmem:[%s15] sm:$0x1]
    %17 = vrot.lane.b32.xlu0 %v16, 8
    %v18 = vpop.permute.xlu0 %17
    %vm19 = vcmask 97344
    %20 = vst.msk [vmem:[#allocation0] sm:$0x1] %vm19, %v18
    %s21 = scalar_lea.vmem [#allocation1], 1
    %v22 = vld [vmem:[%s21] sm:$0x1]
    %23 = vrot.lane.b32.xlu0 %v22, 4
    %v24 = vpop.permute.xlu0 %23
    %vm25 = vcmask 64544
    %26 = vst.msk [vmem:[#allocation0] sm:$0x1] %vm25, %v24
    %s28 = sshllo.u32 0, 1
    %v30 = vld [vmem:[#allocation0] sm:%s28]
    %s31 = sshllo.u32 0, 1
    %32 = vst [vmem:[%s1] sm:%s31] %v30

// kernel: deblur_forward.7
$region0: #{deblur_forward.7}
  #allocation0 [shape = 'u32[]', space=smem, size = 0x4, offset = 0x4, fixed_abs, tag = 'smem constant byte address 0x4 - core index']
  #allocation1 [shape = 'u32[144,128]{1,0:T(1,128)}', space=vmem, size = 0x12000, scoped, tag = 'internal scratch']
  %s0 = inlined_call_operand.vmem [shape: f32[32,64], index: 0, kind: input, shape index: {}]
  %s1 = inlined_call_operand.vmem [shape: f32[64,128], index: 1, kind: input, shape index: {}]
  %s2 = inlined_call_operand.vmem [shape: f32[128,128], index: 2, kind: input, shape index: {}]
  %s3 = inlined_call_operand.vmem [shape: f32[1,128], index: 3, kind: input, shape index: {}]
  %s4 = inlined_call_operand.vmem [shape: f32[1,128], index: 4, kind: input, shape index: {}]
  %s5 = inlined_call_operand.vmem [shape: f32[32,128], index: 5, kind: output, shape index: {}]
  %s6 = sld [smem:[#allocation0]]
  $region30: #{deblur_forward.7} parent=0
    _
  %s8 = ssub.s32 1, %s6
  %s9 = scalar_select 0, %s8, %s6
  // Predicated region
  $region2: #{deblur_forward.7} parent=0 // pred_check
    _
  $region3: #{deblur_forward.7} parent=0 // pred_check_branch
    %11 = sbr.rel (0) target = $region5
  $region4: #{deblur_forward.7} parent=0 // pred_region
    _
  $region5: #{deblur_forward.7} parent=0 // pred_fallthru
    _
  // Predicated region
  $region6: #{deblur_forward.7} parent=0 // pred_check
    _
  $region7: #{deblur_forward.7} parent=0 // pred_check_branch
    %13 = sbr.rel (0) target = $region9
  $region8: #{deblur_forward.7} parent=0 // pred_region
    _
  $region9: #{deblur_forward.7} parent=0 // pred_fallthru
    _
  // Predicated region
  $region10: #{deblur_forward.7} parent=0 // pred_check
    _
  $region11: #{deblur_forward.7} parent=0 // pred_check_branch
    %15 = sbr.rel (0) target = $region13
  $region12: #{deblur_forward.7} parent=0 // pred_region
    _
  $region13: #{deblur_forward.7} parent=0 // pred_fallthru
    _
  // Predicated region
  $region14: #{deblur_forward.7} parent=0 // pred_check
    _
  $region15: #{deblur_forward.7} parent=0 // pred_check_branch
    %17 = sbr.rel (0) target = $region17
  $region16: #{deblur_forward.7} parent=0 // pred_region
    _
  $region17: #{deblur_forward.7} parent=0 // pred_fallthru
    _
  // Predicated region
  $region18: #{deblur_forward.7} parent=0 // pred_check
    _
  $region19: #{deblur_forward.7} parent=0 // pred_check_branch
    %19 = sbr.rel (0) target = $region21
  $region20: #{deblur_forward.7} parent=0 // pred_region
    _
  $region21: #{deblur_forward.7} parent=0 // pred_fallthru
    _
  %v20 = vld [vmem:[%s0] sm:$0xff]
  %v21 = vld [vmem:[%s0 + $0x8] sm:$0xff]
  %v22 = vld [vmem:[%s0 + $0x10] sm:$0xff]
  %v23 = vld [vmem:[%s0 + $0x18] sm:$0xff]
  %v24 = vld [vmem:[%s1] sm:$0xff]
  %v25 = vld [vmem:[%s1 + $0x8] sm:$0xff]
  %v26 = vld [vmem:[%s1 + $0x10] sm:$0xff]
  %v27 = vld [vmem:[%s1 + $0x18] sm:$0xff]
  %v28 = vld [vmem:[%s1 + $0x20] sm:$0xff]
  %v29 = vld [vmem:[%s1 + $0x28] sm:$0xff]
  %v30 = vld [vmem:[%s1 + $0x30] sm:$0xff]
  %v31 = vld [vmem:[%s1 + $0x38] sm:$0xff]
  %vm32 = vcmask 523264
  %v34 = vsel %vm32, %v20, 0
  %v37 = vsel %vm32, %v21, 0
  %v40 = vsel %vm32, %v22, 0
  %v43 = vsel %vm32, %v23, 0
  %45 = vmatprep.subr.mxu0 0.0
  %46 = vmatpush1.msra.mxu0 %v24
  %47 = vmatprep.subr.mxu0 0.0
  %48 = vmatpush1.msra.mxu0 %v25
  %49 = vmatprep.subr.mxu0 0.0
  %50 = vmatpush1.msra.mxu0 %v26
  %51 = vmatprep.subr.mxu0 0.0
  %52 = vmatpush1.msra.mxu0 %v27
  %53 = vmatprep.subr.mxu0 0.0
  %54 = vmatpush1.msra.mxu0 %v28
  %55 = vmatprep.subr.mxu0 0.0
  %56 = vmatpush1.msra.mxu0 %v29
  %57 = vmatprep.subr.mxu0 0.0
  %58 = vmatpush1.msra.mxu0 %v30
  %59 = vmatprep.subr.mxu0 0.0
  %60 = vmatpush1.msra.mxu0 %v31
  %61 = vmatprep.subr.mxu0 0.0
  %62 = vmatpush1.msra.mxu0 0.0
  %63 = vmatprep.subr.mxu0 0.0
  %64 = vmatpush1.msra.mxu0 0.0
  %65 = vmatprep.subr.mxu0 0.0
  %66 = vmatpush1.msra.mxu0 0.0
  %67 = vmatprep.subr.mxu0 0.0
  %68 = vmatpush1.msra.mxu0 0.0
  %69 = vmatprep.subr.mxu0 0.0
  %70 = vmatpush1.msra.mxu0 0.0
  %71 = vmatprep.subr.mxu0 0.0
  %72 = vmatpush1.msra.mxu0 0.0
  %73 = vmatprep.subr.mxu0 0.0
  %74 = vmatpush1.msra.mxu0 0.0
  %75 = vmatprep.subr.mxu0 0.0
  %76 = vmatpush1.msra.mxu0 0.0
  %77 = vmatprep.subr.mxu0 0.0
  %78 = vmatpush1.msra.mxu0 0.0
  %79 = vmatprep.subr.mxu0 0.0
  %80 = vmatpush1.msra.mxu0 0.0
  %81 = vmatprep.subr.mxu0 0.0
  %82 = vmatpush1.msra.mxu0 0.0
  %83 = vmatprep.subr.mxu0 0.0
  %84 = vmatpush1.msra.mxu0 0.0
  %85 = vmatprep.subr.mxu0 0.0
  %86 = vmatpush1.msra.mxu0 0.0
  %87 = vmatprep.subr.mxu0 0.0
  %88 = vmatpush1.msra.mxu0 0.0
  %89 = vmatprep.subr.mxu0 0.0
  %90 = vmatpush1.msra.mxu0 0.0
  %91 = vmatprep.subr.mxu0 0.0
  %92 = vmatpush1.msra.mxu0 0.0
  %93 = vmatprep.subr.mxu0 0.0
  %94 = vmatpush1.msra.mxu0 0.0
  %95 = vmatprep.subr.mxu0 0.0
  %96 = vmatpush1.msra.mxu0 0.0
  %97 = vmatprep.subr.mxu0 0.0
  %98 = vmatpush1.msra.mxu0 0.0
  %99 = vmatprep.subr.mxu0 0.0
  %100 = vmatpush1.msra.mxu0 0.0
  %101 = vmatprep.subr.mxu0 0.0
  %102 = vmatpush1.msra.mxu0 0.0
  %103 = vmatprep.subr.mxu0 0.0
  %104 = vmatpush1.msra.mxu0 0.0
  %105 = vmatprep.subr.mxu0 0.0
  %106 = vmatpush1.msra.mxu0 0.0
  %107 = vmatprep.subr.mxu0 0.0
  %108 = vmatpush1.msra.mxu0 0.0
  %109 = vmatprep.mubr.f32.mxu0 0.0
  %110 = vmatmul.mubr.f32.gmra.mrb[0].mxu0 %v34
  %v111 = vpop.f32.mrb[0].mxu0
  %v112 = vadd.f32 0.0, %v111
  %v113 = vpop.f32.mrb[0].mxu0
  %114 = vmatprep.mubr.f32.mxu0 0.0
  %115 = vmatmul.mubr.f32.gmra.mrb[0].mxu0 %v37
  %v116 = vpop.f32.mrb[0].mxu0
  %v117 = vadd.f32 0.0, %v116
  %v118 = vpop.f32.mrb[0].mxu0
  %119 = vmatprep.mubr.f32.mxu0 0.0
  %120 = vmatmul.mubr.f32.gmra.mrb[0].mxu0 %v40
  %v121 = vpop.f32.mrb[0].mxu0
  %v122 = vadd.f32 0.0, %v121
  %v123 = vpop.f32.mrb[0].mxu0
  %124 = vmatprep.mubr.f32.mxu0 0.0
  %125 = vmatmul.mubr.f32.gmra.mrb[0].mxu0 %v43
  %v126 = vpop.f32.mrb[0].mxu0
  %v127 = vadd.f32 0.0, %v126
  %v128 = vpop.f32.mrb[0].mxu0
  %129 = vdwg.mxu0
  %v130 = vadd.f32 %v112, %v117
  %v131 = vadd.f32 %v130, %v122
  %v132 = vadd.f32 %v131, %v127
  %v133 = vrot.slane %v132, 4
  %v134 = vadd.f32 %v132, %v133
  %v135 = vrot.slane %v134, 2
  %v136 = vadd.f32 %v134, %v135
  %v137 = vrot.slane %v136, 1
  %v138 = vadd.f32 %v136, %v137
  %v139 = vmul.f32 %v112, %v112
  %v140 = vmul.f32 %v117, %v117
  %v141 = vmul.f32 %v122, %v122
  %v142 = vmul.f32 %v127, %v127
  %v143 = vadd.f32 %v139, %v140
  %v144 = vadd.f32 %v143, %v141
  %v145 = vadd.f32 %v144, %v142
  %v146 = vrot.slane %v145, 4
  %v147 = vadd.f32 %v145, %v146
  %v148 = vrot.slane %v147, 2
  %v149 = vadd.f32 %v147, %v148
  %v150 = vrot.slane %v149, 1
  %v151 = vadd.f32 %v149, %v150
  %v152 = vlaneseq
  %v153 = vshrl.u32 %v152, 7
  %vm154 = vcmp.eq.s32.totalorder %v153, 0
  %vm155 = vcmp.eq.s32.totalorder %v153, 1
  %v156 = vsel %vm155, %v151, 0.0
  %v157 = vsel %vm154, %v138, %v156
  %v158 = vld [vmem:[%s2] sm:$0xff]
  %v159 = vld [vmem:[%s2 + $0x8] sm:$0xff]
  %v160 = vld [vmem:[%s2 + $0x10] sm:$0xff]
  %v161 = vld [vmem:[%s2 + $0x18] sm:$0xff]
  %v162 = vld [vmem:[%s2 + $0x20] sm:$0xff]
  %v163 = vld [vmem:[%s2 + $0x28] sm:$0xff]
  %v164 = vld [vmem:[%s2 + $0x30] sm:$0xff]
  %v165 = vld [vmem:[%s2 + $0x38] sm:$0xff]
  %v166 = vld [vmem:[%s2 + $0x40] sm:$0xff]
  %v167 = vld [vmem:[%s2 + $0x48] sm:$0xff]
  %v168 = vld [vmem:[%s2 + $0x50] sm:$0xff]
  %v169 = vld [vmem:[%s2 + $0x58] sm:$0xff]
  %v170 = vld [vmem:[%s2 + $0x60] sm:$0xff]
  %v171 = vld [vmem:[%s2 + $0x68] sm:$0xff]
  %v172 = vld [vmem:[%s2 + $0x70] sm:$0xff]
  %v173 = vld [vmem:[%s2 + $0x78] sm:$0xff]
  %174 = vmatprep.subr.mxu0 0.0
  %175 = vmatpush1.msra.mxu0 %v158
  %176 = vmatprep.subr.mxu0 0.0
  %177 = vmatpush1.msra.mxu0 %v159
  %178 = vmatprep.subr.mxu0 0.0
  %179 = vmatpush1.msra.mxu0 %v160
  %180 = vmatprep.subr.mxu0 0.0
  %181 = vmatpush1.msra.mxu0 %v161
  %182 = vmatprep.subr.mxu0 0.0
  %183 = vmatpush1.msra.mxu0 %v162
  %184 = vmatprep.subr.mxu0 0.0
  %185 = vmatpush1.msra.mxu0 %v163
  %186 = vmatprep.subr.mxu0 0.0
  %187 = vmatpush1.msra.mxu0 %v164
  %188 = vmatprep.subr.mxu0 0.0
  %189 = vmatpush1.msra.mxu0 %v165
  %190 = vmatprep.subr.mxu0 0.0
  %191 = vmatpush1.msra.mxu0 %v166
  %192 = vmatprep.subr.mxu0 0.0
  %193 = vmatpush1.msra.mxu0 %v167
  %194 = vmatprep.subr.mxu0 0.0
  %195 = vmatpush1.msra.mxu0 %v168
  %196 = vmatprep.subr.mxu0 0.0
  %197 = vmatpush1.msra.mxu0 %v169
  %198 = vmatprep.subr.mxu0 0.0
  %199 = vmatpush1.msra.mxu0 %v170
  %200 = vmatprep.subr.mxu0 0.0
  %201 = vmatpush1.msra.mxu0 %v171
  %202 = vmatprep.subr.mxu0 0.0
  %203 = vmatpush1.msra.mxu0 %v172
  %204 = vmatprep.subr.mxu0 0.0
  %205 = vmatpush1.msra.mxu0 %v173
  %206 = vmatprep.subr.mxu0 0.0
  %207 = vmatpush1.msra.mxu0 0.0
  %208 = vmatprep.subr.mxu0 0.0
  %209 = vmatpush1.msra.mxu0 0.0
  %210 = vmatprep.subr.mxu0 0.0
  %211 = vmatpush1.msra.mxu0 0.0
  %212 = vmatprep.subr.mxu0 0.0
  %213 = vmatpush1.msra.mxu0 0.0
  %214 = vmatprep.subr.mxu0 0.0
  %215 = vmatpush1.msra.mxu0 0.0
  %216 = vmatprep.subr.mxu0 0.0
  %217 = vmatpush1.msra.mxu0 0.0
  %218 = vmatprep.subr.mxu0 0.0
  %219 = vmatpush1.msra.mxu0 0.0
  %220 = vmatprep.subr.mxu0 0.0
  %221 = vmatpush1.msra.mxu0 0.0
  %222 = vmatprep.subr.mxu0 0.0
  %223 = vmatpush1.msra.mxu0 0.0
  %224 = vmatprep.subr.mxu0 0.0
  %225 = vmatpush1.msra.mxu0 0.0
  %226 = vmatprep.subr.mxu0 0.0
  %227 = vmatpush1.msra.mxu0 0.0
  %228 = vmatprep.subr.mxu0 0.0
  %229 = vmatpush1.msra.mxu0 0.0
  %230 = vmatprep.subr.mxu0 0.0
  %231 = vmatpush1.msra.mxu0 0.0
  %232 = vmatprep.subr.mxu0 0.0
  %233 = vmatpush1.msra.mxu0 0.0
  %234 = vmatprep.subr.mxu0 0.0
  %235 = vmatpush1.msra.mxu0 0.0
  %236 = vmatprep.subr.mxu0 0.0
  %237 = vmatpush1.msra.mxu0 0.0
  %238 = vmatprep.mubr.f32.mxu0 0.0
  %239 = vmatmul.mubr.f32.gmra.mrb[0].mxu0 %v157
  %v240 = vpop.f32.mrb[0].mxu0
  %v241 = vadd.f32 0.0, %v240
  %v242 = vpop.f32.mrb[0].mxu0
  %243 = vdwg.mxu0
  %v244 = vmul.f32 %v241, %v241
  %v246 = vrot.slane %v244, 7
  %v248 = vsub.f32 %v241, %v246
  %v249 = vld [vmem:[%s3] sm:$0x1]
  %v250 = vadd.f32 %v248, 1e-05
  %v251 = vrsqrt.pop %v250
  %v254 = vunpack.c.l.s4 1966171168
  %v255 = vunpack.c.0.s8 %v254
  %v256 = vlaneseq
  %v257 = vshrl.u32 %v256, 7
  %v258 = vsub.s32 %v255, %v257
  %v259 = vrot.slane %v251, %v258
  %v260 = vcombine.high %v259, %v259
  %v262 = vunpack.c.l.s4 1966171168
  %v263 = vunpack.c.0.s8 %v262
  %v264 = vlaneseq
  %v265 = vshrl.u32 %v264, 7
  %v266 = vsub.s32 %v263, %v265
  %v267 = vrot.slane %v260, %v266
  %v269 = vmul.f32 %v249, %v267
  %v270 = vld [vmem:[%s4] sm:$0x1]
  %v271 = vmul.f32 %v241, %v269
  %v272 = vsub.f32 %v270, %v271
  %v274 = vlaneseq
  %v275 = vshrl.u32 %v274, 7
  %v276 = vsub.s32 0, %v275
  %v277 = vrot.slane %v269, %v276
  %v279 = vmul.f32 %v112, %v277
  %v280 = vmul.f32 %v117, %v277
  %v281 = vmul.f32 %v122, %v277
  %v282 = vmul.f32 %v127, %v277
  %v284 = vlaneseq
  %v285 = vshrl.u32 %v284, 7
  %v286 = vsub.s32 0, %v285
  %v287 = vrot.slane %v272, %v286
  %v289 = vadd.f32 %v279, %v287
  %v290 = vadd.f32 %v280, %v287
  %v291 = vadd.f32 %v281, %v287
  %v292 = vadd.f32 %v282, %v287
  %293 = vst [vmem:[%s5] sm:$0xff] %v289
  %294 = vst [vmem:[%s5 + $0x8] sm:$0xff] %v290
  %295 = vst [vmem:[%s5 + $0x10] sm:$0xff] %v291
  %296 = vst [vmem:[%s5 + $0x18] sm:$0xff] %v292
  // Predicated region
  $region22: #{deblur_forward.7} parent=0 // pred_check
    _
  $region23: #{deblur_forward.7} parent=0 // pred_check_branch
    %298 = sbr.rel (0) target = $region25
  $region24: #{deblur_forward.7} parent=0 // pred_region
    _
  $region25: #{deblur_forward.7} parent=0 // pred_fallthru
    _
  // Predicated region
  $region26: #{deblur_forward.7} parent=0 // pred_check
    _
  $region27: #{deblur_forward.7} parent=0 // pred_check_branch
    %300 = sbr.rel (0) target = $region29
  $region28: #{deblur_forward.7} parent=0 // pred_region
    _
  $region29: #{deblur_forward.7} parent=0 // pred_fallthru
    _

// kernel: deblur_forward.8
$region0: #{deblur_forward.8}
  #allocation0 [shape = 'u32[]', space=smem, size = 0x4, offset = 0x4, fixed_abs, tag = 'smem constant byte address 0x4 - core index']
  #allocation1 [shape = 'u32[144,128]{1,0:T(1,128)}', space=vmem, size = 0x12000, scoped, tag = 'internal scratch']
  %s0 = inlined_call_operand.vmem [shape: f32[128,32], index: 0, kind: input, shape index: {}]
  %s1 = inlined_call_operand.vmem [shape: f32[32,128], index: 1, kind: input, shape index: {}]
  %s2 = inlined_call_operand.vmem [shape: f32[128,128], index: 2, kind: input, shape index: {}]
  %s3 = inlined_call_operand.vmem [shape: f32[1,128], index: 3, kind: input, shape index: {}]
  %s4 = inlined_call_operand.vmem [shape: f32[1,128], index: 4, kind: input, shape index: {}]
  %s5 = inlined_call_operand.vmem [shape: f32[128,128], index: 5, kind: output, shape index: {}]
  %s6 = sld [smem:[#allocation0]]
  $region30: #{deblur_forward.8} parent=0
    _
  %s8 = ssub.s32 1, %s6
  %s9 = scalar_select 0, %s8, %s6
  // Predicated region
  $region2: #{deblur_forward.8} parent=0 // pred_check
    _
  $region3: #{deblur_forward.8} parent=0 // pred_check_branch
    %11 = sbr.rel (0) target = $region5
  $region4: #{deblur_forward.8} parent=0 // pred_region
    _
  $region5: #{deblur_forward.8} parent=0 // pred_fallthru
    _
  // Predicated region
  $region6: #{deblur_forward.8} parent=0 // pred_check
    _
  $region7: #{deblur_forward.8} parent=0 // pred_check_branch
    %13 = sbr.rel (0) target = $region9
  $region8: #{deblur_forward.8} parent=0 // pred_region
    _
  $region9: #{deblur_forward.8} parent=0 // pred_fallthru
    _
  // Predicated region
  $region10: #{deblur_forward.8} parent=0 // pred_check
    _
  $region11: #{deblur_forward.8} parent=0 // pred_check_branch
    %15 = sbr.rel (0) target = $region13
  $region12: #{deblur_forward.8} parent=0 // pred_region
    _
  $region13: #{deblur_forward.8} parent=0 // pred_fallthru
    _
  // Predicated region
  $region14: #{deblur_forward.8} parent=0 // pred_check
    _
  $region15: #{deblur_forward.8} parent=0 // pred_check_branch
    %17 = sbr.rel (0) target = $region17
  $region16: #{deblur_forward.8} parent=0 // pred_region
    _
  $region17: #{deblur_forward.8} parent=0 // pred_fallthru
    _
  // Predicated region
  $region18: #{deblur_forward.8} parent=0 // pred_check
    _
  $region19: #{deblur_forward.8} parent=0 // pred_check_branch
    %19 = sbr.rel (0) target = $region21
  $region20: #{deblur_forward.8} parent=0 // pred_region
    _
  $region21: #{deblur_forward.8} parent=0 // pred_fallthru
    _
  %v20 = vld [vmem:[%s0] sm:$0xff]
  %v21 = vld [vmem:[%s0 + $0x8] sm:$0xff]
  %v22 = vld [vmem:[%s0 + $0x10] sm:$0xff]
  %v23 = vld [vmem:[%s0 + $0x18] sm:$0xff]
  %v24 = vld [vmem:[%s0 + $0x20] sm:$0xff]
  %v25 = vld [vmem:[%s0 + $0x28] sm:$0xff]
  %v26 = vld [vmem:[%s0 + $0x30] sm:$0xff]
  %v27 = vld [vmem:[%s0 + $0x38] sm:$0xff]
  %v28 = vld [vmem:[%s0 + $0x40] sm:$0xff]
  %v29 = vld [vmem:[%s0 + $0x48] sm:$0xff]
  %v30 = vld [vmem:[%s0 + $0x50] sm:$0xff]
  %v31 = vld [vmem:[%s0 + $0x58] sm:$0xff]
  %v32 = vld [vmem:[%s0 + $0x60] sm:$0xff]
  %v33 = vld [vmem:[%s0 + $0x68] sm:$0xff]
  %v34 = vld [vmem:[%s0 + $0x70] sm:$0xff]
  %v35 = vld [vmem:[%s0 + $0x78] sm:$0xff]
  %v36 = vld [vmem:[%s1] sm:$0xff]
  %v37 = vld [vmem:[%s1 + $0x8] sm:$0xff]
  %v38 = vld [vmem:[%s1 + $0x10] sm:$0xff]
  %v39 = vld [vmem:[%s1 + $0x18] sm:$0xff]
  %vm40 = vcmask 261120
  %v42 = vsel %vm40, %v20, 0
  %v45 = vsel %vm40, %v21, 0
  %v48 = vsel %vm40, %v22, 0
  %v51 = vsel %vm40, %v23, 0
  %v54 = vsel %vm40, %v24, 0
  %v57 = vsel %vm40, %v25, 0
  %v60 = vsel %vm40, %v26, 0
  %v63 = vsel %vm40, %v27, 0
  %v66 = vsel %vm40, %v28, 0
  %v69 = vsel %vm40, %v29, 0
  %v72 = vsel %vm40, %v30, 0
  %v75 = vsel %vm40, %v31, 0
  %v78 = vsel %vm40, %v32, 0
  %v81 = vsel %vm40, %v33, 0
  %v84 = vsel %vm40, %v34, 0
  %v87 = vsel %vm40, %v35, 0
  %89 = vmatprep.subr.mxu0 0.0
  %90 = vmatpush1.msra.mxu0 %v36
  %91 = vmatprep.subr.mxu0 0.0
  %92 = vmatpush1.msra.mxu0 %v37
  %93 = vmatprep.subr.mxu0 0.0
  %94 = vmatpush1.msra.mxu0 %v38
  %95 = vmatprep.subr.mxu0 0.0
  %96 = vmatpush1.msra.mxu0 %v39
  %97 = vmatprep.subr.mxu0 0.0
  %98 = vmatpush1.msra.mxu0 0.0
  %99 = vmatprep.subr.mxu0 0.0
  %100 = vmatpush1.msra.mxu0 0.0
  %101 = vmatprep.subr.mxu0 0.0
  %102 = vmatpush1.msra.mxu0 0.0
  %103 = vmatprep.subr.mxu0 0.0
  %104 = vmatpush1.msra.mxu0 0.0
  %105 = vmatprep.subr.mxu0 0.0
  %106 = vmatpush1.msra.mxu0 0.0
  %107 = vmatprep.subr.mxu0 0.0
  %108 = vmatpush1.msra.mxu0 0.0
  %109 = vmatprep.subr.mxu0 0.0
  %110 = vmatpush1.msra.mxu0 0.0
  %111 = vmatprep.subr.mxu0 0.0
  %112 = vmatpush1.msra.mxu0 0.0
  %113 = vmatprep.subr.mxu0 0.0
  %114 = vmatpush1.msra.mxu0 0.0
  %115 = vmatprep.subr.mxu0 0.0
  %116 = vmatpush1.msra.mxu0 0.0
  %117 = vmatprep.subr.mxu0 0.0
  %118 = vmatpush1.msra.mxu0 0.0
  %119 = vmatprep.subr.mxu0 0.0
  %120 = vmatpush1.msra.mxu0 0.0
  %121 = vmatprep.subr.mxu0 0.0
  %122 = vmatpush1.msra.mxu0 0.0
  %123 = vmatprep.subr.mxu0 0.0
  %124 = vmatpush1.msra.mxu0 0.0
  %125 = vmatprep.subr.mxu0 0.0
  %126 = vmatpush1.msra.mxu0 0.0
  %127 = vmatprep.subr.mxu0 0.0
  %128 = vmatpush1.msra.mxu0 0.0
  %129 = vmatprep.subr.mxu0 0.0
  %130 = vmatpush1.msra.mxu0 0.0
  %131 = vmatprep.subr.mxu0 0.0
  %132 = vmatpush1.msra.mxu0 0.0
  %133 = vmatprep.subr.mxu0 0.0
  %134 = vmatpush1.msra.mxu0 0.0
  %135 = vmatprep.subr.mxu0 0.0
  %136 = vmatpush1.msra.mxu0 0.0
  %137 = vmatprep.subr.mxu0 0.0
  %138 = vmatpush1.msra.mxu0 0.0
  %139 = vmatprep.subr.mxu0 0.0
  %140 = vmatpush1.msra.mxu0 0.0
  %141 = vmatprep.subr.mxu0 0.0
  %142 = vmatpush1.msra.mxu0 0.0
  %143 = vmatprep.subr.mxu0 0.0
  %144 = vmatpush1.msra.mxu0 0.0
  %145 = vmatprep.subr.mxu0 0.0
  %146 = vmatpush1.msra.mxu0 0.0
  %147 = vmatprep.subr.mxu0 0.0
  %148 = vmatpush1.msra.mxu0 0.0
  %149 = vmatprep.subr.mxu0 0.0
  %150 = vmatpush1.msra.mxu0 0.0
  %151 = vmatprep.subr.mxu0 0.0
  %152 = vmatpush1.msra.mxu0 0.0
  %153 = vmatprep.mubr.f32.mxu0 0.0
  %154 = vmatmul.mubr.f32.gmra.mrb[0].mxu0 %v42
  %v155 = vpop.f32.mrb[0].mxu0
  %v156 = vadd.f32 0.0, %v155
  %v157 = vpop.f32.mrb[0].mxu0
  %158 = vmatprep.mubr.f32.mxu0 0.0
  %159 = vmatmul.mubr.f32.gmra.mrb[0].mxu0 %v45
  %v160 = vpop.f32.mrb[0].mxu0
  %v161 = vadd.f32 0.0, %v160
  %v162 = vpop.f32.mrb[0].mxu0
  %163 = vmatprep.mubr.f32.mxu0 0.0
  %164 = vmatmul.mubr.f32.gmra.mrb[0].mxu0 %v48
  %v165 = vpop.f32.mrb[0].mxu0
  %v166 = vadd.f32 0.0, %v165
  %v167 = vpop.f32.mrb[0].mxu0
  %168 = vmatprep.mubr.f32.mxu0 0.0
  %169 = vmatmul.mubr.f32.gmra.mrb[0].mxu0 %v51
  %v170 = vpop.f32.mrb[0].mxu0
  %v171 = vadd.f32 0.0, %v170
  %v172 = vpop.f32.mrb[0].mxu0
  %173 = vmatprep.mubr.f32.mxu0 0.0
  %174 = vmatmul.mubr.f32.gmra.mrb[0].mxu0 %v54
  %v175 = vpop.f32.mrb[0].mxu0
  %v176 = vadd.f32 0.0, %v175
  %v177 = vpop.f32.mrb[0].mxu0
  %178 = vmatprep.mubr.f32.mxu0 0.0
  %179 = vmatmul.mubr.f32.gmra.mrb[0].mxu0 %v57
  %v180 = vpop.f32.mrb[0].mxu0
  %v181 = vadd.f32 0.0, %v180
  %v182 = vpop.f32.mrb[0].mxu0
  %183 = vmatprep.mubr.f32.mxu0 0.0
  %184 = vmatmul.mubr.f32.gmra.mrb[0].mxu0 %v60
  %v185 = vpop.f32.mrb[0].mxu0
  %v186 = vadd.f32 0.0, %v185
  %v187 = vpop.f32.mrb[0].mxu0
  %188 = vmatprep.mubr.f32.mxu0 0.0
  %189 = vmatmul.mubr.f32.gmra.mrb[0].mxu0 %v63
  %v190 = vpop.f32.mrb[0].mxu0
  %v191 = vadd.f32 0.0, %v190
  %v192 = vpop.f32.mrb[0].mxu0
  %193 = vmatprep.mubr.f32.mxu0 0.0
  %194 = vmatmul.mubr.f32.gmra.mrb[0].mxu0 %v66
  %v195 = vpop.f32.mrb[0].mxu0
  %v196 = vadd.f32 0.0, %v195
  %v197 = vpop.f32.mrb[0].mxu0
  %198 = vmatprep.mubr.f32.mxu0 0.0
  %199 = vmatmul.mubr.f32.gmra.mrb[0].mxu0 %v69
  %v200 = vpop.f32.mrb[0].mxu0
  %v201 = vadd.f32 0.0, %v200
  %v202 = vpop.f32.mrb[0].mxu0
  %203 = vmatprep.mubr.f32.mxu0 0.0
  %204 = vmatmul.mubr.f32.gmra.mrb[0].mxu0 %v72
  %v205 = vpop.f32.mrb[0].mxu0
  %v206 = vadd.f32 0.0, %v205
  %v207 = vpop.f32.mrb[0].mxu0
  %208 = vmatprep.mubr.f32.mxu0 0.0
  %209 = vmatmul.mubr.f32.gmra.mrb[0].mxu0 %v75
  %v210 = vpop.f32.mrb[0].mxu0
  %v211 = vadd.f32 0.0, %v210
  %v212 = vpop.f32.mrb[0].mxu0
  %213 = vmatprep.mubr.f32.mxu0 0.0
  %214 = vmatmul.mubr.f32.gmra.mrb[0].mxu0 %v78
  %v215 = vpop.f32.mrb[0].mxu0
  %v216 = vadd.f32 0.0, %v215
  %v217 = vpop.f32.mrb[0].mxu0
  %218 = vmatprep.mubr.f32.mxu0 0.0
  %219 = vmatmul.mubr.f32.gmra.mrb[0].mxu0 %v81
  %v220 = vpop.f32.mrb[0].mxu0
  %v221 = vadd.f32 0.0, %v220
  %v222 = vpop.f32.mrb[0].mxu0
  %223 = vmatprep.mubr.f32.mxu0 0.0
  %224 = vmatmul.mubr.f32.gmra.mrb[0].mxu0 %v84
  %v225 = vpop.f32.mrb[0].mxu0
  %v226 = vadd.f32 0.0, %v225
  %v227 = vpop.f32.mrb[0].mxu0
  %228 = vmatprep.mubr.f32.mxu0 0.0
  %229 = vmatmul.mubr.f32.gmra.mrb[0].mxu0 %v87
  %v230 = vpop.f32.mrb[0].mxu0
  %v231 = vadd.f32 0.0, %v230
  %v232 = vpop.f32.mrb[0].mxu0
  %233 = vdwg.mxu0
  %v234 = vadd.f32 %v156, %v161
  %v235 = vadd.f32 %v234, %v166
  %v236 = vadd.f32 %v235, %v171
  %v237 = vadd.f32 %v236, %v176
  %v238 = vadd.f32 %v237, %v181
  %v239 = vadd.f32 %v238, %v186
  %v240 = vadd.f32 %v239, %v191
  %v241 = vadd.f32 %v240, %v196
  %v242 = vadd.f32 %v241, %v201
  %v243 = vadd.f32 %v242, %v206
  %v244 = vadd.f32 %v243, %v211
  %v245 = vadd.f32 %v244, %v216
  %v246 = vadd.f32 %v245, %v221
  %v247 = vadd.f32 %v246, %v226
  %v248 = vadd.f32 %v247, %v231
  %v249 = vrot.slane %v248, 4
  %v250 = vadd.f32 %v248, %v249
  %v251 = vrot.slane %v250, 2
  %v252 = vadd.f32 %v250, %v251
  %v253 = vrot.slane %v252, 1
  %v254 = vadd.f32 %v252, %v253
  %v255 = vmul.f32 %v156, %v156
  %v256 = vmul.f32 %v161, %v161
  %v257 = vmul.f32 %v166, %v166
  %v258 = vmul.f32 %v171, %v171
  %v259 = vmul.f32 %v176, %v176
  %v260 = vmul.f32 %v181, %v181
  %v261 = vmul.f32 %v186, %v186
  %v262 = vmul.f32 %v191, %v191
  %v263 = vmul.f32 %v196, %v196
  %v264 = vmul.f32 %v201, %v201
  %v265 = vmul.f32 %v206, %v206
  %v266 = vmul.f32 %v211, %v211
  %v267 = vmul.f32 %v216, %v216
  %v268 = vmul.f32 %v221, %v221
  %v269 = vmul.f32 %v226, %v226
  %v270 = vmul.f32 %v231, %v231
  %v271 = vadd.f32 %v255, %v256
  %v272 = vadd.f32 %v271, %v257
  %v273 = vadd.f32 %v272, %v258
  %v274 = vadd.f32 %v273, %v259
  %v275 = vadd.f32 %v274, %v260
  %v276 = vadd.f32 %v275, %v261
  %v277 = vadd.f32 %v276, %v262
  %v278 = vadd.f32 %v277, %v263
  %v279 = vadd.f32 %v278, %v264
  %v280 = vadd.f32 %v279, %v265
  %v281 = vadd.f32 %v280, %v266
  %v282 = vadd.f32 %v281, %v267
  %v283 = vadd.f32 %v282, %v268
  %v284 = vadd.f32 %v283, %v269
  %v285 = vadd.f32 %v284, %v270
  %v286 = vrot.slane %v285, 4
  %v287 = vadd.f32 %v285, %v286
  %v288 = vrot.slane %v287, 2
  %v289 = vadd.f32 %v287, %v288
  %v290 = vrot.slane %v289, 1
  %v291 = vadd.f32 %v289, %v290
  %v292 = vlaneseq
  %v293 = vshrl.u32 %v292, 7
  %vm294 = vcmp.eq.s32.totalorder %v293, 0
  %vm295 = vcmp.eq.s32.totalorder %v293, 1
  %v296 = vsel %vm295, %v291, 0.0
  %v297 = vsel %vm294, %v254, %v296
  %v298 = vld [vmem:[%s2] sm:$0xff]
  %v299 = vld [vmem:[%s2 + $0x8] sm:$0xff]
  %v300 = vld [vmem:[%s2 + $0x10] sm:$0xff]
  %v301 = vld [vmem:[%s2 + $0x18] sm:$0xff]
  %v302 = vld [vmem:[%s2 + $0x20] sm:$0xff]
  %v303 = vld [vmem:[%s2 + $0x28] sm:$0xff]
  %v304 = vld [vmem:[%s2 + $0x30] sm:$0xff]
  %v305 = vld [vmem:[%s2 + $0x38] sm:$0xff]
  %v306 = vld [vmem:[%s2 + $0x40] sm:$0xff]
  %v307 = vld [vmem:[%s2 + $0x48] sm:$0xff]
  %v308 = vld [vmem:[%s2 + $0x50] sm:$0xff]
  %v309 = vld [vmem:[%s2 + $0x58] sm:$0xff]
  %v310 = vld [vmem:[%s2 + $0x60] sm:$0xff]
  %v311 = vld [vmem:[%s2 + $0x68] sm:$0xff]
  %v312 = vld [vmem:[%s2 + $0x70] sm:$0xff]
  %v313 = vld [vmem:[%s2 + $0x78] sm:$0xff]
  %314 = vmatprep.subr.mxu0 0.0
  %315 = vmatpush1.msra.mxu0 %v298
  %316 = vmatprep.subr.mxu0 0.0
  %317 = vmatpush1.msra.mxu0 %v299
  %318 = vmatprep.subr.mxu0 0.0
  %319 = vmatpush1.msra.mxu0 %v300
  %320 = vmatprep.subr.mxu0 0.0
  %321 = vmatpush1.msra.mxu0 %v301
  %322 = vmatprep.subr.mxu0 0.0
  %323 = vmatpush1.msra.mxu0 %v302
  %324 = vmatprep.subr.mxu0 0.0
  %325 = vmatpush1.msra.mxu0 %v303
  %326 = vmatprep.subr.mxu0 0.0
  %327 = vmatpush1.msra.mxu0 %v304
  %328 = vmatprep.subr.mxu0 0.0
  %329 = vmatpush1.msra.mxu0 %v305
  %330 = vmatprep.subr.mxu0 0.0
  %331 = vmatpush1.msra.mxu0 %v306
  %332 = vmatprep.subr.mxu0 0.0
  %333 = vmatpush1.msra.mxu0 %v307
  %334 = vmatprep.subr.mxu0 0.0
  %335 = vmatpush1.msra.mxu0 %v308
  %336 = vmatprep.subr.mxu0 0.0
  %337 = vmatpush1.msra.mxu0 %v309
  %338 = vmatprep.subr.mxu0 0.0
  %339 = vmatpush1.msra.mxu0 %v310
  %340 = vmatprep.subr.mxu0 0.0
  %341 = vmatpush1.msra.mxu0 %v311
  %342 = vmatprep.subr.mxu0 0.0
  %343 = vmatpush1.msra.mxu0 %v312
  %344 = vmatprep.subr.mxu0 0.0
  %345 = vmatpush1.msra.mxu0 %v313
  %346 = vmatprep.subr.mxu0 0.0
  %347 = vmatpush1.msra.mxu0 0.0
  %348 = vmatprep.subr.mxu0 0.0
  %349 = vmatpush1.msra.mxu0 0.0
  %350 = vmatprep.subr.mxu0 0.0
  %351 = vmatpush1.msra.mxu0 0.0
  %352 = vmatprep.subr.mxu0 0.0
  %353 = vmatpush1.msra.mxu0 0.0
  %354 = vmatprep.subr.mxu0 0.0
  %355 = vmatpush1.msra.mxu0 0.0
  %356 = vmatprep.subr.mxu0 0.0
  %357 = vmatpush1.msra.mxu0 0.0
  %358 = vmatprep.subr.mxu0 0.0
  %359 = vmatpush1.msra.mxu0 0.0
  %360 = vmatprep.subr.mxu0 0.0
  %361 = vmatpush1.msra.mxu0 0.0
  %362 = vmatprep.subr.mxu0 0.0
  %363 = vmatpush1.msra.mxu0 0.0
  %364 = vmatprep.subr.mxu0 0.0
  %365 = vmatpush1.msra.mxu0 0.0
  %366 = vmatprep.subr.mxu0 0.0
  %367 = vmatpush1.msra.mxu0 0.0
  %368 = vmatprep.subr.mxu0 0.0
  %369 = vmatpush1.msra.mxu0 0.0
  %370 = vmatprep.subr.mxu0 0.0
  %371 = vmatpush1.msra.mxu0 0.0
  %372 = vmatprep.subr.mxu0 0.0
  %373 = vmatpush1.msra.mxu0 0.0
  %374 = vmatprep.subr.mxu0 0.0
  %375 = vmatpush1.msra.mxu0 0.0
  %376 = vmatprep.subr.mxu0 0.0
  %377 = vmatpush1.msra.mxu0 0.0
  %378 = vmatprep.mubr.f32.mxu0 0.0
  %379 = vmatmul.mubr.f32.gmra.mrb[0].mxu0 %v297
  %v380 = vpop.f32.mrb[0].mxu0
  %v381 = vadd.f32 0.0, %v380
  %v382 = vpop.f32.mrb[0].mxu0
  %383 = vdwg.mxu0
  %v384 = vmul.f32 %v381, %v381
  %v386 = vrot.slane %v384, 7
  %v388 = vsub.f32 %v381, %v386
  %v389 = vld [vmem:[%s3] sm:$0x1]
  %v390 = vadd.f32 %v388, 1e-05
  %v391 = vrsqrt.pop %v390
  %v394 = vunpack.c.l.s4 1966171168
  %v395 = vunpack.c.0.s8 %v394
  %v396 = vlaneseq
  %v397 = vshrl.u32 %v396, 7
  %v398 = vsub.s32 %v395, %v397
  %v399 = vrot.slane %v391, %v398
  %v400 = vcombine.high %v399, %v399
  %v402 = vunpack.c.l.s4 1966171168
  %v403 = vunpack.c.0.s8 %v402
  %v404 = vlaneseq
  %v405 = vshrl.u32 %v404, 7
  %v406 = vsub.s32 %v403, %v405
  %v407 = vrot.slane %v400, %v406
  %v409 = vmul.f32 %v389, %v407
  %v410 = vld [vmem:[%s4] sm:$0x1]
  %v411 = vmul.f32 %v381, %v409
  %v412 = vsub.f32 %v410, %v411
  %v414 = vlaneseq
  %v415 = vshrl.u32 %v414, 7
  %v416 = vsub.s32 0, %v415
  %v417 = vrot.slane %v409, %v416
  %v419 = vmul.f32 %v156, %v417
  %v420 = vmul.f32 %v161, %v417
  %v421 = vmul.f32 %v166, %v417
  %v422 = vmul.f32 %v171, %v417
  %v423 = vmul.f32 %v176, %v417
  %v424 = vmul.f32 %v181, %v417
  %v425 = vmul.f32 %v186, %v417
  %v426 = vmul.f32 %v191, %v417
  %v427 = vmul.f32 %v196, %v417
  %v428 = vmul.f32 %v201, %v417
  %v429 = vmul.f32 %v206, %v417
  %v430 = vmul.f32 %v211, %v417
  %v431 = vmul.f32 %v216, %v417
  %v432 = vmul.f32 %v221, %v417
  %v433 = vmul.f32 %v226, %v417
  %v434 = vmul.f32 %v231, %v417
  %v436 = vlaneseq
  %v437 = vshrl.u32 %v436, 7
  %v438 = vsub.s32 0, %v437
  %v439 = vrot.slane %v412, %v438
  %v441 = vadd.f32 %v419, %v439
  %v442 = vadd.f32 %v420, %v439
  %v443 = vadd.f32 %v421, %v439
  %v444 = vadd.f32 %v422, %v439
  %v445 = vadd.f32 %v423, %v439
  %v446 = vadd.f32 %v424, %v439
  %v447 = vadd.f32 %v425, %v439
  %v448 = vadd.f32 %v426, %v439
  %v449 = vadd.f32 %v427, %v439
  %v450 = vadd.f32 %v428, %v439
  %v451 = vadd.f32 %v429, %v439
  %v452 = vadd.f32 %v430, %v439
  %v453 = vadd.f32 %v431, %v439
  %v454 = vadd.f32 %v432, %v439
  %v455 = vadd.f32 %v433, %v439
  %v456 = vadd.f32 %v434, %v439
  %457 = vst [vmem:[%s5] sm:$0xff] %v441
  %458 = vst [vmem:[%s5 + $0x8] sm:$0xff] %v442
  %459 = vst [vmem:[%s5 + $0x10] sm:$0xff] %v443
  %460 = vst [vmem:[%s5 + $0x18] sm:$0xff] %v444
  %461 = vst [vmem:[%s5 + $0x20] sm:$0xff] %v445
  %462 = vst [vmem:[%s5 + $0x28] sm:$0xff] %v446
  %463 = vst [vmem:[%s5 + $0x30] sm:$0xff] %v447
  %464 = vst [vmem:[%s5 + $0x38] sm:$0xff] %v448
  %465 = vst [vmem:[%s5 + $0x40] sm:$0xff] %v449
  %466 = vst [vmem:[%s5 + $0x48] sm:$0xff] %v450
  %467 = vst [vmem:[%s5 + $0x50] sm:$0xff] %v451
  %468 = vst [vmem:[%s5 + $0x58] sm:$0xff] %v452
  %469 = vst [vmem:[%s5 + $0x60] sm:$0xff] %v453
  %470 = vst [vmem:[%s5 + $0x68] sm:$0xff] %v454
  %471 = vst [vmem:[%s5 + $0x70] sm:$0xff] %v455
  %472 = vst [vmem:[%s5 + $0x78] sm:$0xff] %v456
  // Predicated region
  $region22: #{deblur_forward.8} parent=0 // pred_check
    _
  $region23: #{deblur_forward.8} parent=0 // pred_check_branch
    %474 = sbr.rel (0) target = $region25
  $region24: #{deblur_forward.8} parent=0 // pred_region
    _
  $region25: #{deblur_forward.8} parent=0 // pred_fallthru
    _
  // Predicated region
  $region26: #{deblur_forward.8} parent=0 // pred_check
    _
  $region27: #{deblur_forward.8} parent=0 // pred_check_branch
    %476 = sbr.rel (0) target = $region29
  $region28: #{deblur_forward.8} parent=0 // pred_region
    _
  $region29: #{deblur_forward.8} parent=0 // pred_fallthru
    _

// kernel: deblur_forward.9
$region0: #{deblur_forward.9}
  #allocation0 [shape = 'u32[]', space=smem, size = 0x4, offset = 0x4, fixed_abs, tag = 'smem constant byte address 0x4 - core index']
  #allocation1 [shape = 'u32[144,128]{1,0:T(1,128)}', space=vmem, size = 0x12000, scoped, tag = 'internal scratch']
  %s0 = inlined_call_operand.vmem [shape: f32[512,36], index: 0, kind: input, shape index: {}]
  %s1 = inlined_call_operand.vmem [shape: f32[36,128], index: 1, kind: input, shape index: {}]
  %s2 = inlined_call_operand.vmem [shape: f32[1,128], index: 2, kind: input, shape index: {}]
  %s3 = inlined_call_operand.vmem [shape: f32[512,128], index: 3, kind: output, shape index: {}]
  %s4 = sld [smem:[#allocation0]]
  $region22: #{deblur_forward.9} parent=0
    _
  %s6 = ssub.s32 1, %s4
  %s7 = scalar_select 0, %s6, %s4
  // Predicated region
  $region2: #{deblur_forward.9} parent=0 // pred_check
    _
  $region3: #{deblur_forward.9} parent=0 // pred_check_branch
    %9 = sbr.rel (0) target = $region5
  $region4: #{deblur_forward.9} parent=0 // pred_region
    _
  $region5: #{deblur_forward.9} parent=0 // pred_fallthru
    _
  // Predicated region
  $region6: #{deblur_forward.9} parent=0 // pred_check
    _
  $region7: #{deblur_forward.9} parent=0 // pred_check_branch
    %11 = sbr.rel (0) target = $region9
  $region8: #{deblur_forward.9} parent=0 // pred_region
    _
  $region9: #{deblur_forward.9} parent=0 // pred_fallthru
    _
  // Predicated region
  $region10: #{deblur_forward.9} parent=0 // pred_check
    _
  $region11: #{deblur_forward.9} parent=0 // pred_check_branch
    %13 = sbr.rel (0) target = $region13
  $region12: #{deblur_forward.9} parent=0 // pred_region
    _
  $region13: #{deblur_forward.9} parent=0 // pred_fallthru
    _
  %v14 = vld [vmem:[%s0] sm:$0xff]
  %v15 = vld [vmem:[%s0 + $0x8] sm:$0xff]
  %v16 = vld [vmem:[%s0 + $0x10] sm:$0xff]
  %v17 = vld [vmem:[%s0 + $0x18] sm:$0xff]
  %v18 = vld [vmem:[%s0 + $0x20] sm:$0xff]
  %v19 = vld [vmem:[%s0 + $0x28] sm:$0xff]
  %v20 = vld [vmem:[%s0 + $0x30] sm:$0xff]
  %v21 = vld [vmem:[%s0 + $0x38] sm:$0xff]
  %v22 = vld [vmem:[%s0 + $0x40] sm:$0xff]
  %v23 = vld [vmem:[%s0 + $0x48] sm:$0xff]
  %v24 = vld [vmem:[%s0 + $0x50] sm:$0xff]
  %v25 = vld [vmem:[%s0 + $0x58] sm:$0xff]
  %v26 = vld [vmem:[%s0 + $0x60] sm:$0xff]
  %v27 = vld [vmem:[%s0 + $0x68] sm:$0xff]
  %v28 = vld [vmem:[%s0 + $0x70] sm:$0xff]
  %v29 = vld [vmem:[%s0 + $0x78] sm:$0xff]
  %v30 = vld [vmem:[%s0 + $0x80] sm:$0xff]
  %v31 = vld [vmem:[%s0 + $0x88] sm:$0xff]
  %v32 = vld [vmem:[%s0 + $0x90] sm:$0xff]
  %v33 = vld [vmem:[%s0 + $0x98] sm:$0xff]
  %v34 = vld [vmem:[%s0 + $0xa0] sm:$0xff]
  %v35 = vld [vmem:[%s0 + $0xa8] sm:$0xff]
  %v36 = vld [vmem:[%s0 + $0xb0] sm:$0xff]
  %v37 = vld [vmem:[%s0 + $0xb8] sm:$0xff]
  %v38 = vld [vmem:[%s0 + $0xc0] sm:$0xff]
  %v39 = vld [vmem:[%s0 + $0xc8] sm:$0xff]
  %v40 = vld [vmem:[%s0 + $0xd0] sm:$0xff]
  %v41 = vld [vmem:[%s0 + $0xd8] sm:$0xff]
  %v42 = vld [vmem:[%s0 + $0xe0] sm:$0xff]
  %v43 = vld [vmem:[%s0 + $0xe8] sm:$0xff]
  %v44 = vld [vmem:[%s0 + $0xf0] sm:$0xff]
  %v45 = vld [vmem:[%s0 + $0xf8] sm:$0xff]
  %v46 = vld [vmem:[%s0 + $0x100] sm:$0xff]
  %v47 = vld [vmem:[%s0 + $0x108] sm:$0xff]
  %v48 = vld [vmem:[%s0 + $0x110] sm:$0xff]
  %v49 = vld [vmem:[%s0 + $0x118] sm:$0xff]
  %v50 = vld [vmem:[%s0 + $0x120] sm:$0xff]
  %v51 = vld [vmem:[%s0 + $0x128] sm:$0xff]
  %v52 = vld [vmem:[%s0 + $0x130] sm:$0xff]
  %v53 = vld [vmem:[%s0 + $0x138] sm:$0xff]
  %v54 = vld [vmem:[%s0 + $0x140] sm:$0xff]
  %v55 = vld [vmem:[%s0 + $0x148] sm:$0xff]
  %v56 = vld [vmem:[%s0 + $0x150] sm:$0xff]
  %v57 = vld [vmem:[%s0 + $0x158] sm:$0xff]
  %v58 = vld [vmem:[%s0 + $0x160] sm:$0xff]
  %v59 = vld [vmem:[%s0 + $0x168] sm:$0xff]
  %v60 = vld [vmem:[%s0 + $0x170] sm:$0xff]
  %v61 = vld [vmem:[%s0 + $0x178] sm:$0xff]
  %v62 = vld [vmem:[%s0 + $0x180] sm:$0xff]
  %v63 = vld [vmem:[%s0 + $0x188] sm:$0xff]
  %v64 = vld [vmem:[%s0 + $0x190] sm:$0xff]
  %v65 = vld [vmem:[%s0 + $0x198] sm:$0xff]
  %v66 = vld [vmem:[%s0 + $0x1a0] sm:$0xff]
  %v67 = vld [vmem:[%s0 + $0x1a8] sm:$0xff]
  %v68 = vld [vmem:[%s0 + $0x1b0] sm:$0xff]
  %v69 = vld [vmem:[%s0 + $0x1b8] sm:$0xff]
  %v70 = vld [vmem:[%s0 + $0x1c0] sm:$0xff]
  %v71 = vld [vmem:[%s0 + $0x1c8] sm:$0xff]
  %v72 = vld [vmem:[%s0 + $0x1d0] sm:$0xff]
  %v73 = vld [vmem:[%s0 + $0x1d8] sm:$0xff]
  %v74 = vld [vmem:[%s0 + $0x1e0] sm:$0xff]
  %v75 = vld [vmem:[%s0 + $0x1e8] sm:$0xff]
  %v76 = vld [vmem:[%s0 + $0x1f0] sm:$0xff]
  %v77 = vld [vmem:[%s0 + $0x1f8] sm:$0xff]
  %v78 = vld [vmem:[%s1] sm:$0xff]
  %v79 = vld [vmem:[%s1 + $0x8] sm:$0xff]
  %v80 = vld [vmem:[%s1 + $0x10] sm:$0xff]
  %v81 = vld [vmem:[%s1 + $0x18] sm:$0xff]
  %v82 = vld [vmem:[%s1 + $0x20] sm:$0xf]
  %v83 = vld [vmem:[%s2] sm:$0x1]
  %v85 = vlaneseq
  %v86 = vshrl.u32 %v85, 7
  %v87 = vsub.s32 0, %v86
  %v88 = vrot.slane %v83, %v87
  %vm90 = vcmask 293888
  %v92 = vsel %vm90, %v14, 0
  %v95 = vsel %vm90, %v15, 0
  %v98 = vsel %vm90, %v16, 0
  %v101 = vsel %vm90, %v17, 0
  %v104 = vsel %vm90, %v18, 0
  %v107 = vsel %vm90, %v19, 0
  %v110 = vsel %vm90, %v20, 0
  %v113 = vsel %vm90, %v21, 0
  %v116 = vsel %vm90, %v22, 0
  %v119 = vsel %vm90, %v23, 0
  %v122 = vsel %vm90, %v24, 0
  %v125 = vsel %vm90, %v25, 0
  %v128 = vsel %vm90, %v26, 0
  %v131 = vsel %vm90, %v27, 0
  %v134 = vsel %vm90, %v28, 0
  %v137 = vsel %vm90, %v29, 0
  %v140 = vsel %vm90, %v30, 0
  %v143 = vsel %vm90, %v31, 0
  %v146 = vsel %vm90, %v32, 0
  %v149 = vsel %vm90, %v33, 0
  %v152 = vsel %vm90, %v34, 0
  %v155 = vsel %vm90, %v35, 0
  %v158 = vsel %vm90, %v36, 0
  %v161 = vsel %vm90, %v37, 0
  %v164 = vsel %vm90, %v38, 0
  %v167 = vsel %vm90, %v39, 0
  %v170 = vsel %vm90, %v40, 0
  %v173 = vsel %vm90, %v41, 0
  %v176 = vsel %vm90, %v42, 0
  %v179 = vsel %vm90, %v43, 0
  %v182 = vsel %vm90, %v44, 0
  %v185 = vsel %vm90, %v45, 0
  %v188 = vsel %vm90, %v46, 0
  %v191 = vsel %vm90, %v47, 0
  %v194 = vsel %vm90, %v48, 0
  %v197 = vsel %vm90, %v49, 0
  %v200 = vsel %vm90, %v50, 0
  %v203 = vsel %vm90, %v51, 0
  %v206 = vsel %vm90, %v52, 0
  %v209 = vsel %vm90, %v53, 0
  %v212 = vsel %vm90, %v54, 0
  %v215 = vsel %vm90, %v55, 0
  %v218 = vsel %vm90, %v56, 0
  %v221 = vsel %vm90, %v57, 0
  %v224 = vsel %vm90, %v58, 0
  %v227 = vsel %vm90, %v59, 0
  %v230 = vsel %vm90, %v60, 0
  %v233 = vsel %vm90, %v61, 0
  %v236 = vsel %vm90, %v62, 0
  %v239 = vsel %vm90, %v63, 0
  %v242 = vsel %vm90, %v64, 0
  %v245 = vsel %vm90, %v65, 0
  %v248 = vsel %vm90, %v66, 0
  %v251 = vsel %vm90, %v67, 0
  %v254 = vsel %vm90, %v68, 0
  %v257 = vsel %vm90, %v69, 0
  %v260 = vsel %vm90, %v70, 0
  %v263 = vsel %vm90, %v71, 0
  %v266 = vsel %vm90, %v72, 0
  %v269 = vsel %vm90, %v73, 0
  %v272 = vsel %vm90, %v74, 0
  %v275 = vsel %vm90, %v75, 0
  %v278 = vsel %vm90, %v76, 0
  %v281 = vsel %vm90, %v77, 0
  %vm283 = vcmask 1043456
  %v285 = vsel %vm283, %v82, 0
  %287 = vmatprep.subr.mxu0 0.0
  %288 = vmatpush1.msra.mxu0 %v78
  %289 = vmatprep.subr.mxu0 0.0
  %290 = vmatpush1.msra.mxu0 %v79
  %291 = vmatprep.subr.mxu0 0.0
  %292 = vmatpush1.msra.mxu0 %v80
  %293 = vmatprep.subr.mxu0 0.0
  %294 = vmatpush1.msra.mxu0 %v81
  %295 = vmatprep.subr.mxu0 0.0
  %296 = vmatpush1.msra.mxu0 %v285
  %297 = vmatprep.subr.mxu0 0.0
  %298 = vmatpush1.msra.mxu0 0.0
  %299 = vmatprep.subr.mxu0 0.0
  %300 = vmatpush1.msra.mxu0 0.0
  %301 = vmatprep.subr.mxu0 0.0
  %302 = vmatpush1.msra.mxu0 0.0
  %303 = vmatprep.subr.mxu0 0.0
  %304 = vmatpush1.msra.mxu0 0.0
  %305 = vmatprep.subr.mxu0 0.0
  %306 = vmatpush1.msra.mxu0 0.0
  %307 = vmatprep.subr.mxu0 0.0
  %308 = vmatpush1.msra.mxu0 0.0
  %309 = vmatprep.subr.mxu0 0.0
  %310 = vmatpush1.msra.mxu0 0.0
  %311 = vmatprep.subr.mxu0 0.0
  %312 = vmatpush1.msra.mxu0 0.0
  %313 = vmatprep.subr.mxu0 0.0
  %314 = vmatpush1.msra.mxu0 0.0
  %315 = vmatprep.subr.mxu0 0.0
  %316 = vmatpush1.msra.mxu0 0.0
  %317 = vmatprep.subr.mxu0 0.0
  %318 = vmatpush1.msra.mxu0 0.0
  %319 = vmatprep.subr.mxu0 0.0
  %320 = vmatpush1.msra.mxu0 0.0
  %321 = vmatprep.subr.mxu0 0.0
  %322 = vmatpush1.msra.mxu0 0.0
  %323 = vmatprep.subr.mxu0 0.0
  %324 = vmatpush1.msra.mxu0 0.0
  %325 = vmatprep.subr.mxu0 0.0
  %326 = vmatpush1.msra.mxu0 0.0
  %327 = vmatprep.subr.mxu0 0.0
  %328 = vmatpush1.msra.mxu0 0.0
  %329 = vmatprep.subr.mxu0 0.0
  %330 = vmatpush1.msra.mxu0 0.0
  %331 = vmatprep.subr.mxu0 0.0
  %332 = vmatpush1.msra.mxu0 0.0
  %333 = vmatprep.subr.mxu0 0.0
  %334 = vmatpush1.msra.mxu0 0.0
  %335 = vmatprep.subr.mxu0 0.0
  %336 = vmatpush1.msra.mxu0 0.0
  %337 = vmatprep.subr.mxu0 0.0
  %338 = vmatpush1.msra.mxu0 0.0
  %339 = vmatprep.subr.mxu0 0.0
  %340 = vmatpush1.msra.mxu0 0.0
  %341 = vmatprep.subr.mxu0 0.0
  %342 = vmatpush1.msra.mxu0 0.0
  %343 = vmatprep.subr.mxu0 0.0
  %344 = vmatpush1.msra.mxu0 0.0
  %345 = vmatprep.subr.mxu0 0.0
  %346 = vmatpush1.msra.mxu0 0.0
  %347 = vmatprep.subr.mxu0 0.0
  %348 = vmatpush1.msra.mxu0 0.0
  %349 = vmatprep.subr.mxu0 0.0
  %350 = vmatpush1.msra.mxu0 0.0
  %351 = vmatprep.mubr.f32.mxu0 0.0
  %352 = vmatmul.mubr.f32.gmra.mrb[0].mxu0 %v92
  %v353 = vpop.f32.mrb[0].mxu0
  %v354 = vadd.f32 %v88, %v353
  %v355 = vpop.f32.mrb[0].mxu0
  %356 = vmatprep.mubr.f32.mxu0 0.0
  %357 = vmatmul.mubr.f32.gmra.mrb[0].mxu0 %v95
  %v358 = vpop.f32.mrb[0].mxu0
  %v359 = vadd.f32 %v88, %v358
  %v360 = vpop.f32.mrb[0].mxu0
  %361 = vmatprep.mubr.f32.mxu0 0.0
  %362 = vmatmul.mubr.f32.gmra.mrb[0].mxu0 %v98
  %v363 = vpop.f32.mrb[0].mxu0
  %v364 = vadd.f32 %v88, %v363
  %v365 = vpop.f32.mrb[0].mxu0
  %366 = vmatprep.mubr.f32.mxu0 0.0
  %367 = vmatmul.mubr.f32.gmra.mrb[0].mxu0 %v101
  %v368 = vpop.f32.mrb[0].mxu0
  %v369 = vadd.f32 %v88, %v368
  %v370 = vpop.f32.mrb[0].mxu0
  %371 = vmatprep.mubr.f32.mxu0 0.0
  %372 = vmatmul.mubr.f32.gmra.mrb[0].mxu0 %v104
  %v373 = vpop.f32.mrb[0].mxu0
  %v374 = vadd.f32 %v88, %v373
  %v375 = vpop.f32.mrb[0].mxu0
  %376 = vmatprep.mubr.f32.mxu0 0.0
  %377 = vmatmul.mubr.f32.gmra.mrb[0].mxu0 %v107
  %v378 = vpop.f32.mrb[0].mxu0
  %v379 = vadd.f32 %v88, %v378
  %v380 = vpop.f32.mrb[0].mxu0
  %381 = vmatprep.mubr.f32.mxu0 0.0
  %382 = vmatmul.mubr.f32.gmra.mrb[0].mxu0 %v110
  %v383 = vpop.f32.mrb[0].mxu0
  %v384 = vadd.f32 %v88, %v383
  %v385 = vpop.f32.mrb[0].mxu0
  %386 = vmatprep.mubr.f32.mxu0 0.0
  %387 = vmatmul.mubr.f32.gmra.mrb[0].mxu0 %v113
  %v388 = vpop.f32.mrb[0].mxu0
  %v389 = vadd.f32 %v88, %v388
  %v390 = vpop.f32.mrb[0].mxu0
  %391 = vmatprep.mubr.f32.mxu0 0.0
  %392 = vmatmul.mubr.f32.gmra.mrb[0].mxu0 %v116
  %v393 = vpop.f32.mrb[0].mxu0
  %v394 = vadd.f32 %v88, %v393
  %v395 = vpop.f32.mrb[0].mxu0
  %396 = vmatprep.mubr.f32.mxu0 0.0
  %397 = vmatmul.mubr.f32.gmra.mrb[0].mxu0 %v119
  %v398 = vpop.f32.mrb[0].mxu0
  %v399 = vadd.f32 %v88, %v398
  %v400 = vpop.f32.mrb[0].mxu0
  %401 = vmatprep.mubr.f32.mxu0 0.0
  %402 = vmatmul.mubr.f32.gmra.mrb[0].mxu0 %v122
  %v403 = vpop.f32.mrb[0].mxu0
  %v404 = vadd.f32 %v88, %v403
  %v405 = vpop.f32.mrb[0].mxu0
  %406 = vmatprep.mubr.f32.mxu0 0.0
  %407 = vmatmul.mubr.f32.gmra.mrb[0].mxu0 %v125
  %v408 = vpop.f32.mrb[0].mxu0
  %v409 = vadd.f32 %v88, %v408
  %v410 = vpop.f32.mrb[0].mxu0
  %411 = vmatprep.mubr.f32.mxu0 0.0
  %412 = vmatmul.mubr.f32.gmra.mrb[0].mxu0 %v128
  %v413 = vpop.f32.mrb[0].mxu0
  %v414 = vadd.f32 %v88, %v413
  %v415 = vpop.f32.mrb[0].mxu0
  %416 = vmatprep.mubr.f32.mxu0 0.0
  %417 = vmatmul.mubr.f32.gmra.mrb[0].mxu0 %v131
  %v418 = vpop.f32.mrb[0].mxu0
  %v419 = vadd.f32 %v88, %v418
  %v420 = vpop.f32.mrb[0].mxu0
  %421 = vmatprep.mubr.f32.mxu0 0.0
  %422 = vmatmul.mubr.f32.gmra.mrb[0].mxu0 %v134
  %v423 = vpop.f32.mrb[0].mxu0
  %v424 = vadd.f32 %v88, %v423
  %v425 = vpop.f32.mrb[0].mxu0
  %426 = vmatprep.mubr.f32.mxu0 0.0
  %427 = vmatmul.mubr.f32.gmra.mrb[0].mxu0 %v137
  %v428 = vpop.f32.mrb[0].mxu0
  %v429 = vadd.f32 %v88, %v428
  %v430 = vpop.f32.mrb[0].mxu0
  %431 = vmatprep.mubr.f32.mxu0 0.0
  %432 = vmatmul.mubr.f32.gmra.mrb[0].mxu0 %v140
  %v433 = vpop.f32.mrb[0].mxu0
  %v434 = vadd.f32 %v88, %v433
  %v435 = vpop.f32.mrb[0].mxu0
  %436 = vmatprep.mubr.f32.mxu0 0.0
  %437 = vmatmul.mubr.f32.gmra.mrb[0].mxu0 %v143
  %v438 = vpop.f32.mrb[0].mxu0
  %v439 = vadd.f32 %v88, %v438
  %v440 = vpop.f32.mrb[0].mxu0
  %441 = vmatprep.mubr.f32.mxu0 0.0
  %442 = vmatmul.mubr.f32.gmra.mrb[0].mxu0 %v146
  %v443 = vpop.f32.mrb[0].mxu0
  %v444 = vadd.f32 %v88, %v443
  %v445 = vpop.f32.mrb[0].mxu0
  %446 = vmatprep.mubr.f32.mxu0 0.0
  %447 = vmatmul.mubr.f32.gmra.mrb[0].mxu0 %v149
  %v448 = vpop.f32.mrb[0].mxu0
  %v449 = vadd.f32 %v88, %v448
  %v450 = vpop.f32.mrb[0].mxu0
  %451 = vmatprep.mubr.f32.mxu0 0.0
  %452 = vmatmul.mubr.f32.gmra.mrb[0].mxu0 %v152
  %v453 = vpop.f32.mrb[0].mxu0
  %v454 = vadd.f32 %v88, %v453
  %v455 = vpop.f32.mrb[0].mxu0
  %456 = vmatprep.mubr.f32.mxu0 0.0
  %457 = vmatmul.mubr.f32.gmra.mrb[0].mxu0 %v155
  %v458 = vpop.f32.mrb[0].mxu0
  %v459 = vadd.f32 %v88, %v458
  %v460 = vpop.f32.mrb[0].mxu0
  %461 = vmatprep.mubr.f32.mxu0 0.0
  %462 = vmatmul.mubr.f32.gmra.mrb[0].mxu0 %v158
  %v463 = vpop.f32.mrb[0].mxu0
  %v464 = vadd.f32 %v88, %v463
  %v465 = vpop.f32.mrb[0].mxu0
  %466 = vmatprep.mubr.f32.mxu0 0.0
  %467 = vmatmul.mubr.f32.gmra.mrb[0].mxu0 %v161
  %v468 = vpop.f32.mrb[0].mxu0
  %v469 = vadd.f32 %v88, %v468
  %v470 = vpop.f32.mrb[0].mxu0
  %471 = vmatprep.mubr.f32.mxu0 0.0
  %472 = vmatmul.mubr.f32.gmra.mrb[0].mxu0 %v164
  %v473 = vpop.f32.mrb[0].mxu0
  %v474 = vadd.f32 %v88, %v473
  %v475 = vpop.f32.mrb[0].mxu0
  %476 = vmatprep.mubr.f32.mxu0 0.0
  %477 = vmatmul.mubr.f32.gmra.mrb[0].mxu0 %v167
  %v478 = vpop.f32.mrb[0].mxu0
  %v479 = vadd.f32 %v88, %v478
  %v480 = vpop.f32.mrb[0].mxu0
  %481 = vmatprep.mubr.f32.mxu0 0.0
  %482 = vmatmul.mubr.f32.gmra.mrb[0].mxu0 %v170
  %v483 = vpop.f32.mrb[0].mxu0
  %v484 = vadd.f32 %v88, %v483
  %v485 = vpop.f32.mrb[0].mxu0
  %486 = vmatprep.mubr.f32.mxu0 0.0
  %487 = vmatmul.mubr.f32.gmra.mrb[0].mxu0 %v173
  %v488 = vpop.f32.mrb[0].mxu0
  %v489 = vadd.f32 %v88, %v488
  %v490 = vpop.f32.mrb[0].mxu0
  %491 = vmatprep.mubr.f32.mxu0 0.0
  %492 = vmatmul.mubr.f32.gmra.mrb[0].mxu0 %v176
  %v493 = vpop.f32.mrb[0].mxu0
  %v494 = vadd.f32 %v88, %v493
  %v495 = vpop.f32.mrb[0].mxu0
  %496 = vmatprep.mubr.f32.mxu0 0.0
  %497 = vmatmul.mubr.f32.gmra.mrb[0].mxu0 %v179
  %v498 = vpop.f32.mrb[0].mxu0
  %v499 = vadd.f32 %v88, %v498
  %v500 = vpop.f32.mrb[0].mxu0
  %501 = vmatprep.mubr.f32.mxu0 0.0
  %502 = vmatmul.mubr.f32.gmra.mrb[0].mxu0 %v182
  %v503 = vpop.f32.mrb[0].mxu0
  %v504 = vadd.f32 %v88, %v503
  %v505 = vpop.f32.mrb[0].mxu0
  %506 = vmatprep.mubr.f32.mxu0 0.0
  %507 = vmatmul.mubr.f32.gmra.mrb[0].mxu0 %v185
  %v508 = vpop.f32.mrb[0].mxu0
  %v509 = vadd.f32 %v88, %v508
  %v510 = vpop.f32.mrb[0].mxu0
  %511 = vmatprep.mubr.f32.mxu0 0.0
  %512 = vmatmul.mubr.f32.gmra.mrb[0].mxu0 %v188
  %v513 = vpop.f32.mrb[0].mxu0
  %v514 = vadd.f32 %v88, %v513
  %v515 = vpop.f32.mrb[0].mxu0
  %516 = vmatprep.mubr.f32.mxu0 0.0
  %517 = vmatmul.mubr.f32.gmra.mrb[0].mxu0 %v191
  %v518 = vpop.f32.mrb[0].mxu0
  %v519 = vadd.f32 %v88, %v518
  %v520 = vpop.f32.mrb[0].mxu0
  %521 = vmatprep.mubr.f32.mxu0 0.0
  %522 = vmatmul.mubr.f32.gmra.mrb[0].mxu0 %v194
  %v523 = vpop.f32.mrb[0].mxu0
  %v524 = vadd.f32 %v88, %v523
  %v525 = vpop.f32.mrb[0].mxu0
  %526 = vmatprep.mubr.f32.mxu0 0.0
  %527 = vmatmul.mubr.f32.gmra.mrb[0].mxu0 %v197
  %v528 = vpop.f32.mrb[0].mxu0
  %v529 = vadd.f32 %v88, %v528
  %v530 = vpop.f32.mrb[0].mxu0
  %531 = vmatprep.mubr.f32.mxu0 0.0
  %532 = vmatmul.mubr.f32.gmra.mrb[0].mxu0 %v200
  %v533 = vpop.f32.mrb[0].mxu0
  %v534 = vadd.f32 %v88, %v533
  %v535 = vpop.f32.mrb[0].mxu0
  %536 = vmatprep.mubr.f32.mxu0 0.0
  %537 = vmatmul.mubr.f32.gmra.mrb[0].mxu0 %v203
  %v538 = vpop.f32.mrb[0].mxu0
  %v539 = vadd.f32 %v88, %v538
  %v540 = vpop.f32.mrb[0].mxu0
  %541 = vmatprep.mubr.f32.mxu0 0.0
  %542 = vmatmul.mubr.f32.gmra.mrb[0].mxu0 %v206
  %v543 = vpop.f32.mrb[0].mxu0
  %v544 = vadd.f32 %v88, %v543
  %v545 = vpop.f32.mrb[0].mxu0
  %546 = vmatprep.mubr.f32.mxu0 0.0
  %547 = vmatmul.mubr.f32.gmra.mrb[0].mxu0 %v209
  %v548 = vpop.f32.mrb[0].mxu0
  %v549 = vadd.f32 %v88, %v548
  %v550 = vpop.f32.mrb[0].mxu0
  %551 = vmatprep.mubr.f32.mxu0 0.0
  %552 = vmatmul.mubr.f32.gmra.mrb[0].mxu0 %v212
  %v553 = vpop.f32.mrb[0].mxu0
  %v554 = vadd.f32 %v88, %v553
  %v555 = vpop.f32.mrb[0].mxu0
  %556 = vmatprep.mubr.f32.mxu0 0.0
  %557 = vmatmul.mubr.f32.gmra.mrb[0].mxu0 %v215
  %v558 = vpop.f32.mrb[0].mxu0
  %v559 = vadd.f32 %v88, %v558
  %v560 = vpop.f32.mrb[0].mxu0
  %561 = vmatprep.mubr.f32.mxu0 0.0
  %562 = vmatmul.mubr.f32.gmra.mrb[0].mxu0 %v218
  %v563 = vpop.f32.mrb[0].mxu0
  %v564 = vadd.f32 %v88, %v563
  %v565 = vpop.f32.mrb[0].mxu0
  %566 = vmatprep.mubr.f32.mxu0 0.0
  %567 = vmatmul.mubr.f32.gmra.mrb[0].mxu0 %v221
  %v568 = vpop.f32.mrb[0].mxu0
  %v569 = vadd.f32 %v88, %v568
  %v570 = vpop.f32.mrb[0].mxu0
  %571 = vmatprep.mubr.f32.mxu0 0.0
  %572 = vmatmul.mubr.f32.gmra.mrb[0].mxu0 %v224
  %v573 = vpop.f32.mrb[0].mxu0
  %v574 = vadd.f32 %v88, %v573
  %v575 = vpop.f32.mrb[0].mxu0
  %576 = vmatprep.mubr.f32.mxu0 0.0
  %577 = vmatmul.mubr.f32.gmra.mrb[0].mxu0 %v227
  %v578 = vpop.f32.mrb[0].mxu0
  %v579 = vadd.f32 %v88, %v578
  %v580 = vpop.f32.mrb[0].mxu0
  %581 = vmatprep.mubr.f32.mxu0 0.0
  %582 = vmatmul.mubr.f32.gmra.mrb[0].mxu0 %v230
  %v583 = vpop.f32.mrb[0].mxu0
  %v584 = vadd.f32 %v88, %v583
  %v585 = vpop.f32.mrb[0].mxu0
  %586 = vmatprep.mubr.f32.mxu0 0.0
  %587 = vmatmul.mubr.f32.gmra.mrb[0].mxu0 %v233
  %v588 = vpop.f32.mrb[0].mxu0
  %v589 = vadd.f32 %v88, %v588
  %v590 = vpop.f32.mrb[0].mxu0
  %591 = vmatprep.mubr.f32.mxu0 0.0
  %592 = vmatmul.mubr.f32.gmra.mrb[0].mxu0 %v236
  %v593 = vpop.f32.mrb[0].mxu0
  %v594 = vadd.f32 %v88, %v593
  %v595 = vpop.f32.mrb[0].mxu0
  %596 = vmatprep.mubr.f32.mxu0 0.0
  %597 = vmatmul.mubr.f32.gmra.mrb[0].mxu0 %v239
  %v598 = vpop.f32.mrb[0].mxu0
  %v599 = vadd.f32 %v88, %v598
  %v600 = vpop.f32.mrb[0].mxu0
  %601 = vmatprep.mubr.f32.mxu0 0.0
  %602 = vmatmul.mubr.f32.gmra.mrb[0].mxu0 %v242
  %v603 = vpop.f32.mrb[0].mxu0
  %v604 = vadd.f32 %v88, %v603
  %v605 = vpop.f32.mrb[0].mxu0
  %606 = vmatprep.mubr.f32.mxu0 0.0
  %607 = vmatmul.mubr.f32.gmra.mrb[0].mxu0 %v245
  %v608 = vpop.f32.mrb[0].mxu0
  %v609 = vadd.f32 %v88, %v608
  %v610 = vpop.f32.mrb[0].mxu0
  %611 = vmatprep.mubr.f32.mxu0 0.0
  %612 = vmatmul.mubr.f32.gmra.mrb[0].mxu0 %v248
  %v613 = vpop.f32.mrb[0].mxu0
  %v614 = vadd.f32 %v88, %v613
  %v615 = vpop.f32.mrb[0].mxu0
  %616 = vmatprep.mubr.f32.mxu0 0.0
  %617 = vmatmul.mubr.f32.gmra.mrb[0].mxu0 %v251
  %v618 = vpop.f32.mrb[0].mxu0
  %v619 = vadd.f32 %v88, %v618
  %v620 = vpop.f32.mrb[0].mxu0
  %621 = vmatprep.mubr.f32.mxu0 0.0
  %622 = vmatmul.mubr.f32.gmra.mrb[0].mxu0 %v254
  %v623 = vpop.f32.mrb[0].mxu0
  %v624 = vadd.f32 %v88, %v623
  %v625 = vpop.f32.mrb[0].mxu0
  %626 = vmatprep.mubr.f32.mxu0 0.0
  %627 = vmatmul.mubr.f32.gmra.mrb[0].mxu0 %v257
  %v628 = vpop.f32.mrb[0].mxu0
  %v629 = vadd.f32 %v88, %v628
  %v630 = vpop.f32.mrb[0].mxu0
  %631 = vmatprep.mubr.f32.mxu0 0.0
  %632 = vmatmul.mubr.f32.gmra.mrb[0].mxu0 %v260
  %v633 = vpop.f32.mrb[0].mxu0
  %v634 = vadd.f32 %v88, %v633
  %v635 = vpop.f32.mrb[0].mxu0
  %636 = vmatprep.mubr.f32.mxu0 0.0
  %637 = vmatmul.mubr.f32.gmra.mrb[0].mxu0 %v263
  %v638 = vpop.f32.mrb[0].mxu0
  %v639 = vadd.f32 %v88, %v638
  %v640 = vpop.f32.mrb[0].mxu0
  %641 = vmatprep.mubr.f32.mxu0 0.0
  %642 = vmatmul.mubr.f32.gmra.mrb[0].mxu0 %v266
  %v643 = vpop.f32.mrb[0].mxu0
  %v644 = vadd.f32 %v88, %v643
  %v645 = vpop.f32.mrb[0].mxu0
  %646 = vmatprep.mubr.f32.mxu0 0.0
  %647 = vmatmul.mubr.f32.gmra.mrb[0].mxu0 %v269
  %v648 = vpop.f32.mrb[0].mxu0
  %v649 = vadd.f32 %v88, %v648
  %v650 = vpop.f32.mrb[0].mxu0
  %651 = vmatprep.mubr.f32.mxu0 0.0
  %652 = vmatmul.mubr.f32.gmra.mrb[0].mxu0 %v272
  %v653 = vpop.f32.mrb[0].mxu0
  %v654 = vadd.f32 %v88, %v653
  %v655 = vpop.f32.mrb[0].mxu0
  %656 = vmatprep.mubr.f32.mxu0 0.0
  %657 = vmatmul.mubr.f32.gmra.mrb[0].mxu0 %v275
  %v658 = vpop.f32.mrb[0].mxu0
  %v659 = vadd.f32 %v88, %v658
  %v660 = vpop.f32.mrb[0].mxu0
  %661 = vmatprep.mubr.f32.mxu0 0.0
  %662 = vmatmul.mubr.f32.gmra.mrb[0].mxu0 %v278
  %v663 = vpop.f32.mrb[0].mxu0
  %v664 = vadd.f32 %v88, %v663
  %v665 = vpop.f32.mrb[0].mxu0
  %666 = vmatprep.mubr.f32.mxu0 0.0
  %667 = vmatmul.mubr.f32.gmra.mrb[0].mxu0 %v281
  %v668 = vpop.f32.mrb[0].mxu0
  %v669 = vadd.f32 %v88, %v668
  %v670 = vpop.f32.mrb[0].mxu0
  %671 = vdwg.mxu0
  %672 = vst [vmem:[%s3] sm:$0xff] %v354
  %673 = vst [vmem:[%s3 + $0x8] sm:$0xff] %v359
  %674 = vst [vmem:[%s3 + $0x10] sm:$0xff] %v364
  %675 = vst [vmem:[%s3 + $0x18] sm:$0xff] %v369
  %676 = vst [vmem:[%s3 + $0x20] sm:$0xff] %v374
  %677 = vst [vmem:[%s3 + $0x28] sm:$0xff] %v379
  %678 = vst [vmem:[%s3 + $0x30] sm:$0xff] %v384
  %679 = vst [vmem:[%s3 + $0x38] sm:$0xff] %v389
  %680 = vst [vmem:[%s3 + $0x40] sm:$0xff] %v394
  %681 = vst [vmem:[%s3 + $0x48] sm:$0xff] %v399
  %682 = vst [vmem:[%s3 + $0x50] sm:$0xff] %v404
  %683 = vst [vmem:[%s3 + $0x58] sm:$0xff] %v409
  %684 = vst [vmem:[%s3 + $0x60] sm:$0xff] %v414
  %685 = vst [vmem:[%s3 + $0x68] sm:$0xff] %v419
  %686 = vst [vmem:[%s3 + $0x70] sm:$0xff] %v424
  %687 = vst [vmem:[%s3 + $0x78] sm:$0xff] %v429
  %688 = vst [vmem:[%s3 + $0x80] sm:$0xff] %v434
  %689 = vst [vmem:[%s3 + $0x88] sm:$0xff] %v439
  %690 = vst [vmem:[%s3 + $0x90] sm:$0xff] %v444
  %691 = vst [vmem:[%s3 + $0x98] sm:$0xff] %v449
  %692 = vst [vmem:[%s3 + $0xa0] sm:$0xff] %v454
  %693 = vst [vmem:[%s3 + $0xa8] sm:$0xff] %v459
  %694 = vst [vmem:[%s3 + $0xb0] sm:$0xff] %v464
  %695 = vst [vmem:[%s3 + $0xb8] sm:$0xff] %v469
  %696 = vst [vmem:[%s3 + $0xc0] sm:$0xff] %v474
  %697 = vst [vmem:[%s3 + $0xc8] sm:$0xff] %v479
  %698 = vst [vmem:[%s3 + $0xd0] sm:$0xff] %v484
  %699 = vst [vmem:[%s3 + $0xd8] sm:$0xff] %v489
  %700 = vst [vmem:[%s3 + $0xe0] sm:$0xff] %v494
  %701 = vst [vmem:[%s3 + $0xe8] sm:$0xff] %v499
  %702 = vst [vmem:[%s3 + $0xf0] sm:$0xff] %v504
  %703 = vst [vmem:[%s3 + $0xf8] sm:$0xff] %v509
  %704 = vst [vmem:[%s3 + $0x100] sm:$0xff] %v514
  %705 = vst [vmem:[%s3 + $0x108] sm:$0xff] %v519
  %706 = vst [vmem:[%s3 + $0x110] sm:$0xff] %v524
  %707 = vst [vmem:[%s3 + $0x118] sm:$0xff] %v529
  %708 = vst [vmem:[%s3 + $0x120] sm:$0xff] %v534
  %709 = vst [vmem:[%s3 + $0x128] sm:$0xff] %v539
  %710 = vst [vmem:[%s3 + $0x130] sm:$0xff] %v544
  %711 = vst [vmem:[%s3 + $0x138] sm:$0xff] %v549
  %712 = vst [vmem:[%s3 + $0x140] sm:$0xff] %v554
  %713 = vst [vmem:[%s3 + $0x148] sm:$0xff] %v559
  %714 = vst [vmem:[%s3 + $0x150] sm:$0xff] %v564
  %715 = vst [vmem:[%s3 + $0x158] sm:$0xff] %v569
  %716 = vst [vmem:[%s3 + $0x160] sm:$0xff] %v574
  %717 = vst [vmem:[%s3 + $0x168] sm:$0xff] %v579
  %718 = vst [vmem:[%s3 + $0x170] sm:$0xff] %v584
  %719 = vst [vmem:[%s3 + $0x178] sm:$0xff] %v589
  %720 = vst [vmem:[%s3 + $0x180] sm:$0xff] %v594
  %721 = vst [vmem:[%s3 + $0x188] sm:$0xff] %v599
  %722 = vst [vmem:[%s3 + $0x190] sm:$0xff] %v604
  %723 = vst [vmem:[%s3 + $0x198] sm:$0xff] %v609
  %724 = vst [vmem:[%s3 + $0x1a0] sm:$0xff] %v614
  %725 = vst [vmem:[%s3 + $0x1a8] sm:$0xff] %v619
  %726 = vst [vmem:[%s3 + $0x1b0] sm:$0xff] %v624
  %727 = vst [vmem:[%s3 + $0x1b8] sm:$0xff] %v629
  %728 = vst [vmem:[%s3 + $0x1c0] sm:$0xff] %v634
  %729 = vst [vmem:[%s3 + $0x1c8] sm:$0xff] %v639
  %730 = vst [vmem:[%s3 + $0x1d0] sm:$0xff] %v644
  %731 = vst [vmem:[%s3 + $0x1d8] sm:$0xff] %v649
  %732 = vst [vmem:[%s3 + $0x1e0] sm:$0xff] %v654
  %733 = vst [vmem:[%s3 + $0x1e8] sm:$0xff] %v659
  %734 = vst [vmem:[%s3 + $0x1f0] sm:$0xff] %v664
  %735 = vst [vmem:[%s3 + $0x1f8] sm:$0xff] %v669
  // Predicated region
  $region14: #{deblur_forward.9} parent=0 // pred_check
    _
  $region15: #{deblur_forward.9} parent=0 // pred_check_branch
    %737 = sbr.rel (0) target = $region17
  $region16: #{deblur_forward.9} parent=0 // pred_region
    _
  $region17: #{deblur_forward.9} parent=0 // pred_fallthru
    _
  // Predicated region
  $region18: #{deblur_forward.9} parent=0 // pred_check
    _
  $region19: #{deblur_forward.9} parent=0 // pred_check_branch
    %739 = sbr.rel (0) target = $region21
  $region20: #{deblur_forward.9} parent=0 // pred_region
    _
  $region21: #{deblur_forward.9} parent=0 // pred_fallthru
    _

</llo_original>
